<compile_context>
chip_gen: v6e
topology: v6e:2x2x1
jax: 0.10.0
libtpu: 0.0.40
codegen_flags: <defaults>
</compile_context>

<pallas_src>
import jax
import jax.numpy as jnp
from jax import lax
from jax.experimental import pallas as pl
from jax.experimental.pallas import tpu as pltpu


def lstm_kernel(x_ref, wx_ref, b_ref, wh_ref, wl_ref, bl_ref, out_ref):
    """x_ref:  (S,) f32 in SMEM            -- raw inputs (input_size == 1)
       wx_ref: (1, 4*Hp) f32 in VMEM       -- input-projection row, gates i|f|g|o
       b_ref:  (1, 4*Hp) f32 in VMEM       -- combined bias b_ih + b_hh
       wh_ref: (Hp, 4*Hp) bf16 in VMEM     -- recurrent weight, lane-dense gate blocks
       wl_ref: (O, Hp) f32 in VMEM         -- final linear weight, transposed
       bl_ref: (O,) f32 in SMEM            -- final linear bias
       out_ref:(1, O) f32                  -- predictions[-1]"""
    S = x_ref.shape[0]
    Hp = wh_ref.shape[0]
    G = wh_ref.shape[1]            # 4 * Hp

    # Per-lane scale hoisted out of the loop: 0.5 for the sigmoid gates
    # (i, f, o) and 1.0 for the tanh gate (g), so one tanh pass covers all
    # four activations: sigmoid(x) = 0.5 * (1 + tanh(x / 2)).
    lane = lax.broadcasted_iota(jnp.int32, (1, G), 1)
    is_g_gate = (lane >= 2 * Hp) & (lane < 3 * Hp)
    scale = jnp.where(is_g_gate, jnp.float32(1.0), jnp.float32(0.5))

    # Loop-invariant small rows hoisted to vregs (4 vregs each).  wh_ref is
    # intentionally NOT hoisted (32+ vregs) -- it is read inside the dot.
    wx_row = wx_ref[...]           # (1, 4*Hp)
    b_row = b_ref[...]             # (1, 4*Hp)

    h0 = jnp.zeros((1, Hp), jnp.float32)
    c0 = jnp.zeros((1, Hp), jnp.float32)

    def step(t, carry):
        h, c = carry
        # In-kernel x-projection: input_size == 1, so x @ Wx is a broadcast
        # scalar FMA on the VPU. Recurrent term is one fused single-pass bf16
        # MXU matmul (f32 accumulation) over all four gate blocks.
        pre = (x_ref[t] * wx_row + b_row
               + jnp.dot(h.astype(jnp.bfloat16), wh_ref[...],
                         preferred_element_type=jnp.float32))      # (1, 4*Hp)
        tg = jnp.tanh(pre * scale)                                 # one EUP pass
        i_g = 0.5 * (1.0 + tg[:, 0 * Hp:1 * Hp])
        f_g = 0.5 * (1.0 + tg[:, 1 * Hp:2 * Hp])
        g_g = tg[:, 2 * Hp:3 * Hp]
        o_g = 0.5 * (1.0 + tg[:, 3 * Hp:4 * Hp])
        c_new = f_g * c + i_g * g_g       # padded lanes stay exactly 0
        h_new = o_g * jnp.tanh(c_new)
        return h_new, c_new

    h_fin, _ = lax.fori_loop(0, S, step, (h0, c0), unroll=True)

    # Final Linear(H, O) on the last hidden state == predictions[-1].
    # VPU multiply + XLU lane reduce; no MXU weight latch for a 128x1 RHS.
    out_ref[...] = (jnp.sum(h_fin * wl_ref[...], axis=-1, keepdims=True)
                    + bl_ref[0])


def prepare_weights(wx, wh, b, wl, bl):
    """One-time repack of the LSTM/Linear weights into the lane-dense,
    128-padded layout the kernel expects. Do NOT call per inference."""
    I = wx.shape[1]
    H = wx.shape[2]
    O = wl.shape[1]
    Hp = max(128, ((H + 127) // 128) * 128)     # lane-dense padded hidden size
    f32 = jnp.float32

    # Gate blocks of width Hp in PyTorch order [ i | f | g | o ]; padded
    # rows/cols are zero => padded h/c lanes remain exactly zero (see header).
    wx_row = jnp.zeros((I, 4 * Hp), f32)
    wh_pack = jnp.zeros((Hp, 4 * Hp), f32)
    b_row = jnp.zeros((1, 4 * Hp), f32)
    for g in range(4):
        wx_row = wx_row.at[:, g * Hp:g * Hp + H].set(wx[g].astype(f32))
        wh_pack = wh_pack.at[:H, g * Hp:g * Hp + H].set(wh[g].astype(f32))
        b_row = b_row.at[:, g * Hp:g * Hp + H].set(b[g].astype(f32))
    wl_row = jnp.zeros((O, Hp), f32).at[:, :H].set(wl.astype(f32).T)
    bl_vec = bl.astype(f32).reshape((O,))

    # bf16 recurrent weight -> native single-pass MXU matmul (f32 acc).
    wh_bf16 = wh_pack.astype(jnp.bfloat16)
    return dict(wx_row=wx_row, b_row=b_row, wh=wh_bf16,
                wl_row=wl_row, bl=bl_vec, Hp=int(Hp))


def lstm_forward(x, packed):
    """x: (S, I) with I == 1; packed: output of prepare_weights()."""
    S, I = x.shape
    assert I == 1, "kernel folds the x-projection assuming input_size == 1"
    Hp = packed["Hp"]
    G = 4 * Hp
    O = packed["wl_row"].shape[0]
    x_smem = x.reshape((S,)).astype(jnp.float32)

    out = pl.pallas_call(
        lstm_kernel,
        out_shape=jax.ShapeDtypeStruct((1, O), jnp.float32),
        grid_spec=pltpu.PrefetchScalarGridSpec(
            num_scalar_prefetch=0,
            grid=(1,),
            in_specs=[
                pl.BlockSpec(memory_space=pltpu.MemorySpace.SMEM),   # x (S,)
                pl.BlockSpec((1, G), lambda i: (0, 0)),              # wx_row
                pl.BlockSpec((1, G), lambda i: (0, 0)),              # b_row
                pl.BlockSpec((Hp, G), lambda i: (0, 0)),             # Wh (bf16)
                pl.BlockSpec((O, Hp), lambda i: (0, 0)),             # wl_row
                pl.BlockSpec(memory_space=pltpu.MemorySpace.SMEM),   # bl (O,)
            ],
            out_specs=pl.BlockSpec((1, O), lambda i: (0, 0)),
        ),
        compiler_params=pltpu.CompilerParams(
            dimension_semantics=("arbitrary",)),
    )(x_smem, packed["wx_row"], packed["b_row"], packed["wh"],
      packed["wl_row"], packed["bl"])
    return out.reshape((O,))    # == predictions[-1], shape (output_size,)


def lstm_ref(x, wx, wh, b, wl, bl):
    """Pure-JAX f32 reference (unpadded, per-gate) for correctness checking."""
    S = x.shape[0]
    H = wx.shape[2]
    h = jnp.zeros((1, H), jnp.float32)
    c = jnp.zeros((1, H), jnp.float32)
    for t in range(S):
        x_t = x[t:t + 1]
        gates = [x_t @ wx[g] + h @ wh[g] + b[g] for g in range(4)]
        i = jax.nn.sigmoid(gates[0])
        f = jax.nn.sigmoid(gates[1])
        g_ = jnp.tanh(gates[2])
        o = jax.nn.sigmoid(gates[3])
        c = f * c + i * g_
        h = o * jnp.tanh(c)
    return (h @ wl + bl).reshape((-1,))


if __name__ == "__main__":
    # module hyperparameters (defaults of the PyTorch module)
    input_size = 1
    hidden = 100
    output_size = 1
    seq_len = 8

    key = jax.random.PRNGKey(0)
    ks = jax.random.split(key, 6)
    bound = 1.0 / jnp.sqrt(hidden)   # mimic PyTorch uniform(-1/sqrt(H), 1/sqrt(H))

    # input_seq: (S, input_size) time-major, batch=1 squeezed
    x = jax.random.normal(ks[0], (seq_len, input_size), dtype=jnp.float32)

    # gate-stacked weights, PyTorch gate order (i, f, g, o)
    wx = jax.random.uniform(ks[1], (4, input_size, hidden),
                            minval=-bound, maxval=bound, dtype=jnp.float32)
    wh = jax.random.uniform(ks[2], (4, hidden, hidden),
                            minval=-bound, maxval=bound, dtype=jnp.float32)
    # combined bias = b_ih + b_hh
    b = jax.random.uniform(ks[3], (4, 1, hidden),
                           minval=-bound, maxval=bound, dtype=jnp.float32)

    # final linear layer: weight (H, O), bias (1, O)
    wl = jax.random.uniform(ks[4], (hidden, output_size),
                            minval=-bound, maxval=bound, dtype=jnp.float32)
    bl = jax.random.uniform(ks[5], (1, output_size),
                            minval=-bound, maxval=bound, dtype=jnp.float32)

    # One-time weight packing (hoisted out of the per-inference path).
    packed = prepare_weights(wx, wh, b, wl, bl)
    packed = jax.tree_util.tree_map(
        lambda v: jax.block_until_ready(v) if isinstance(v, jax.Array) else v,
        packed)

    pred = lstm_forward(x, packed)
    pred = jax.block_until_ready(pred)

    ref = lstm_ref(x, wx, wh, b, wl, bl)
    # bf16 recurrent matmul (f32 accumulation) holds the 1e-3 tolerance for
    # this 8-step recurrence; rounding error lands ~1e-4 absolute at the output.
    if not jnp.allclose(pred, ref, rtol=1e-3, atol=1e-3):
        raise AssertionError(f"mismatch: kernel={pred} ref={ref}")

    print("KERNEL_OK")
</pallas_src>

<mosaic_0001>
module attributes {stable_mosaic.version = 11 : i64} {
  func.func @lstm_kernel(%arg0: i32, %arg1: memref<8xf32, #tpu.memory_space<smem>>, %arg2: memref<1x512xf32, #tpu.memory_space<vmem>>, %arg3: memref<1x512xf32, #tpu.memory_space<vmem>>, %arg4: memref<128x512xbf16, #tpu.memory_space<vmem>>, %arg5: memref<1x128xf32, #tpu.memory_space<vmem>>, %arg6: memref<1xf32, #tpu.memory_space<smem>>, %arg7: memref<1x1xf32, #tpu.memory_space<vmem>>) attributes {dimension_semantics = [#tpu.dimension_semantics<arbitrary>], iteration_bounds = array<i64: 1>, scalar_prefetch = 0 : i64, scratch_operands = 0 : i64, tpu.core_type = #tpu.core_type<tc>, window_params = [{transform_indices = @transform_0, window_bounds = array<i64: 8>}, {pipeline_mode = #tpu.pipeline_mode<synchronous>, transform_indices = @transform_1, window_bounds = array<i64: 1, 512>}, {pipeline_mode = #tpu.pipeline_mode<synchronous>, transform_indices = @transform_2, window_bounds = array<i64: 1, 512>}, {pipeline_mode = #tpu.pipeline_mode<synchronous>, transform_indices = @transform_3, window_bounds = array<i64: 128, 512>}, {pipeline_mode = #tpu.pipeline_mode<synchronous>, transform_indices = @transform_4, window_bounds = array<i64: 1, 128>}, {transform_indices = @transform_5, window_bounds = array<i64: 1>}, {pipeline_mode = #tpu.pipeline_mode<synchronous>, transform_indices = @transform_6, window_bounds = array<i64: 1, 1>}]} {
    %0 = tpu.iota {dimensions = array<i32: 1>} : vector<1x512xi32>
    %c256_i32 = arith.constant 256 : i32
    %1 = vector.broadcast %c256_i32 : i32 to vector<1x512xi32>
    %2 = arith.cmpi sge, %0, %1 : vector<1x512xi32>
    %c384_i32 = arith.constant 384 : i32
    %3 = vector.broadcast %c384_i32 : i32 to vector<1x512xi32>
    %4 = arith.cmpi slt, %0, %3 : vector<1x512xi32>
    %5 = arith.andi %2, %4 : vector<1x512xi1>
    %cst = arith.constant 1.000000e+00 : f32
    %cst_0 = arith.constant 5.000000e-01 : f32
    %6 = vector.broadcast %cst : f32 to vector<1x512xf32>
    %7 = vector.broadcast %cst_0 : f32 to vector<1x512xf32>
    %8 = arith.select %5, %6, %7 : vector<1x512xi1>, vector<1x512xf32>
    %c0 = arith.constant 0 : index
    %c0_1 = arith.constant 0 : index
    %9 = vector.load %arg2[%c0, %c0_1] : memref<1x512xf32, #tpu.memory_space<vmem>>, vector<1x512xf32>
    %c0_2 = arith.constant 0 : index
    %c0_3 = arith.constant 0 : index
    %10 = vector.load %arg3[%c0_2, %c0_3] : memref<1x512xf32, #tpu.memory_space<vmem>>, vector<1x512xf32>
    %cst_4 = arith.constant 0.000000e+00 : f32
    %11 = vector.broadcast %cst_4 : f32 to vector<1x128xf32>
    %cst_5 = arith.constant 0.000000e+00 : f32
    %12 = vector.broadcast %cst_5 : f32 to vector<1x128xf32>
    %c0_i32 = arith.constant 0 : i32
    %13 = arith.index_cast %c0_i32 : i32 to index
    %14 = memref.load %arg1[%13] : memref<8xf32, #tpu.memory_space<smem>>
    %15 = vector.broadcast %14 : f32 to vector<1x512xf32>
    %16 = arith.mulf %15, %9 : vector<1x512xf32>
    %17 = arith.addf %16, %10 : vector<1x512xf32>
    %18 = arith.truncf %11 : vector<1x128xf32> to vector<1x128xbf16>
    %c0_6 = arith.constant 0 : index
    %c0_7 = arith.constant 0 : index
    %19 = vector.load %arg4[%c0_6, %c0_7] : memref<128x512xbf16, #tpu.memory_space<vmem>>, vector<128x512xbf16>
    %cst_8 = arith.constant dense<0.000000e+00> : vector<1x512xf32>
    %20 = tpu.matmul %18, %19, %cst_8 {dimension_numbers = #tpu.dot_dimension_numbers<[1], [0], [0], [1], [0, 0, 1, 1], [], []>} : vector<1x128xbf16>, vector<128x512xbf16>, vector<1x512xf32> -> vector<1x512xf32>
    %21 = arith.addf %17, %20 : vector<1x512xf32>
    %22 = arith.mulf %21, %8 : vector<1x512xf32>
    %23 = math.tanh %22 : vector<1x512xf32>
    %24 = vector.extract_strided_slice %23 {offsets = [0, 0], sizes = [1, 128], strides = [1, 1]} : vector<1x512xf32> to vector<1x128xf32>
    %cst_9 = arith.constant 1.000000e+00 : f32
    %25 = vector.broadcast %cst_9 : f32 to vector<1x128xf32>
    %26 = arith.addf %25, %24 : vector<1x128xf32>
    %cst_10 = arith.constant 5.000000e-01 : f32
    %27 = vector.broadcast %cst_10 : f32 to vector<1x128xf32>
    %28 = arith.mulf %27, %26 : vector<1x128xf32>
    %29 = vector.extract_strided_slice %23 {offsets = [0, 128], sizes = [1, 128], strides = [1, 1]} : vector<1x512xf32> to vector<1x128xf32>
    %cst_11 = arith.constant 1.000000e+00 : f32
    %30 = vector.broadcast %cst_11 : f32 to vector<1x128xf32>
    %31 = arith.addf %30, %29 : vector<1x128xf32>
    %cst_12 = arith.constant 5.000000e-01 : f32
    %32 = vector.broadcast %cst_12 : f32 to vector<1x128xf32>
    %33 = arith.mulf %32, %31 : vector<1x128xf32>
    %34 = vector.extract_strided_slice %23 {offsets = [0, 256], sizes = [1, 128], strides = [1, 1]} : vector<1x512xf32> to vector<1x128xf32>
    %35 = vector.extract_strided_slice %23 {offsets = [0, 384], sizes = [1, 128], strides = [1, 1]} : vector<1x512xf32> to vector<1x128xf32>
    %cst_13 = arith.constant 1.000000e+00 : f32
    %36 = vector.broadcast %cst_13 : f32 to vector<1x128xf32>
    %37 = arith.addf %36, %35 : vector<1x128xf32>
    %cst_14 = arith.constant 5.000000e-01 : f32
    %38 = vector.broadcast %cst_14 : f32 to vector<1x128xf32>
    %39 = arith.mulf %38, %37 : vector<1x128xf32>
    %40 = arith.mulf %33, %12 : vector<1x128xf32>
    %41 = arith.mulf %28, %34 : vector<1x128xf32>
    %42 = arith.addf %40, %41 : vector<1x128xf32>
    %43 = math.tanh %42 : vector<1x128xf32>
    %44 = arith.mulf %39, %43 : vector<1x128xf32>
    %c1_i32 = arith.constant 1 : i32
    %45 = arith.index_cast %c1_i32 : i32 to index
    %46 = memref.load %arg1[%45] : memref<8xf32, #tpu.memory_space<smem>>
    %47 = vector.broadcast %46 : f32 to vector<1x512xf32>
    %48 = arith.mulf %47, %9 : vector<1x512xf32>
    %49 = arith.addf %48, %10 : vector<1x512xf32>
    %50 = arith.truncf %44 : vector<1x128xf32> to vector<1x128xbf16>
    %c0_15 = arith.constant 0 : index
    %c0_16 = arith.constant 0 : index
    %51 = vector.load %arg4[%c0_15, %c0_16] : memref<128x512xbf16, #tpu.memory_space<vmem>>, vector<128x512xbf16>
    %cst_17 = arith.constant dense<0.000000e+00> : vector<1x512xf32>
    %52 = tpu.matmul %50, %51, %cst_17 {dimension_numbers = #tpu.dot_dimension_numbers<[1], [0], [0], [1], [0, 0, 1, 1], [], []>} : vector<1x128xbf16>, vector<128x512xbf16>, vector<1x512xf32> -> vector<1x512xf32>
    %53 = arith.addf %49, %52 : vector<1x512xf32>
    %54 = arith.mulf %53, %8 : vector<1x512xf32>
    %55 = math.tanh %54 : vector<1x512xf32>
    %56 = vector.extract_strided_slice %55 {offsets = [0, 0], sizes = [1, 128], strides = [1, 1]} : vector<1x512xf32> to vector<1x128xf32>
    %cst_18 = arith.constant 1.000000e+00 : f32
    %57 = vector.broadcast %cst_18 : f32 to vector<1x128xf32>
    %58 = arith.addf %57, %56 : vector<1x128xf32>
    %cst_19 = arith.constant 5.000000e-01 : f32
    %59 = vector.broadcast %cst_19 : f32 to vector<1x128xf32>
    %60 = arith.mulf %59, %58 : vector<1x128xf32>
    %61 = vector.extract_strided_slice %55 {offsets = [0, 128], sizes = [1, 128], strides = [1, 1]} : vector<1x512xf32> to vector<1x128xf32>
    %cst_20 = arith.constant 1.000000e+00 : f32
    %62 = vector.broadcast %cst_20 : f32 to vector<1x128xf32>
    %63 = arith.addf %62, %61 : vector<1x128xf32>
    %cst_21 = arith.constant 5.000000e-01 : f32
    %64 = vector.broadcast %cst_21 : f32 to vector<1x128xf32>
    %65 = arith.mulf %64, %63 : vector<1x128xf32>
    %66 = vector.extract_strided_slice %55 {offsets = [0, 256], sizes = [1, 128], strides = [1, 1]} : vector<1x512xf32> to vector<1x128xf32>
    %67 = vector.extract_strided_slice %55 {offsets = [0, 384], sizes = [1, 128], strides = [1, 1]} : vector<1x512xf32> to vector<1x128xf32>
    %cst_22 = arith.constant 1.000000e+00 : f32
    %68 = vector.broadcast %cst_22 : f32 to vector<1x128xf32>
    %69 = arith.addf %68, %67 : vector<1x128xf32>
    %cst_23 = arith.constant 5.000000e-01 : f32
    %70 = vector.broadcast %cst_23 : f32 to vector<1x128xf32>
    %71 = arith.mulf %70, %69 : vector<1x128xf32>
    %72 = arith.mulf %65, %42 : vector<1x128xf32>
    %73 = arith.mulf %60, %66 : vector<1x128xf32>
    %74 = arith.addf %72, %73 : vector<1x128xf32>
    %75 = math.tanh %74 : vector<1x128xf32>
    %76 = arith.mulf %71, %75 : vector<1x128xf32>
    %c2_i32 = arith.constant 2 : i32
    %77 = arith.index_cast %c2_i32 : i32 to index
    %78 = memref.load %arg1[%77] : memref<8xf32, #tpu.memory_space<smem>>
    %79 = vector.broadcast %78 : f32 to vector<1x512xf32>
    %80 = arith.mulf %79, %9 : vector<1x512xf32>
    %81 = arith.addf %80, %10 : vector<1x512xf32>
    %82 = arith.truncf %76 : vector<1x128xf32> to vector<1x128xbf16>
    %c0_24 = arith.constant 0 : index
    %c0_25 = arith.constant 0 : index
    %83 = vector.load %arg4[%c0_24, %c0_25] : memref<128x512xbf16, #tpu.memory_space<vmem>>, vector<128x512xbf16>
    %cst_26 = arith.constant dense<0.000000e+00> : vector<1x512xf32>
    %84 = tpu.matmul %82, %83, %cst_26 {dimension_numbers = #tpu.dot_dimension_numbers<[1], [0], [0], [1], [0, 0, 1, 1], [], []>} : vector<1x128xbf16>, vector<128x512xbf16>, vector<1x512xf32> -> vector<1x512xf32>
    %85 = arith.addf %81, %84 : vector<1x512xf32>
    %86 = arith.mulf %85, %8 : vector<1x512xf32>
    %87 = math.tanh %86 : vector<1x512xf32>
    %88 = vector.extract_strided_slice %87 {offsets = [0, 0], sizes = [1, 128], strides = [1, 1]} : vector<1x512xf32> to vector<1x128xf32>
    %cst_27 = arith.constant 1.000000e+00 : f32
    %89 = vector.broadcast %cst_27 : f32 to vector<1x128xf32>
    %90 = arith.addf %89, %88 : vector<1x128xf32>
    %cst_28 = arith.constant 5.000000e-01 : f32
    %91 = vector.broadcast %cst_28 : f32 to vector<1x128xf32>
    %92 = arith.mulf %91, %90 : vector<1x128xf32>
    %93 = vector.extract_strided_slice %87 {offsets = [0, 128], sizes = [1, 128], strides = [1, 1]} : vector<1x512xf32> to vector<1x128xf32>
    %cst_29 = arith.constant 1.000000e+00 : f32
    %94 = vector.broadcast %cst_29 : f32 to vector<1x128xf32>
    %95 = arith.addf %94, %93 : vector<1x128xf32>
    %cst_30 = arith.constant 5.000000e-01 : f32
    %96 = vector.broadcast %cst_30 : f32 to vector<1x128xf32>
    %97 = arith.mulf %96, %95 : vector<1x128xf32>
    %98 = vector.extract_strided_slice %87 {offsets = [0, 256], sizes = [1, 128], strides = [1, 1]} : vector<1x512xf32> to vector<1x128xf32>
    %99 = vector.extract_strided_slice %87 {offsets = [0, 384], sizes = [1, 128], strides = [1, 1]} : vector<1x512xf32> to vector<1x128xf32>
    %cst_31 = arith.constant 1.000000e+00 : f32
    %100 = vector.broadcast %cst_31 : f32 to vector<1x128xf32>
    %101 = arith.addf %100, %99 : vector<1x128xf32>
    %cst_32 = arith.constant 5.000000e-01 : f32
    %102 = vector.broadcast %cst_32 : f32 to vector<1x128xf32>
    %103 = arith.mulf %102, %101 : vector<1x128xf32>
    %104 = arith.mulf %97, %74 : vector<1x128xf32>
    %105 = arith.mulf %92, %98 : vector<1x128xf32>
    %106 = arith.addf %104, %105 : vector<1x128xf32>
    %107 = math.tanh %106 : vector<1x128xf32>
    %108 = arith.mulf %103, %107 : vector<1x128xf32>
    %c3_i32 = arith.constant 3 : i32
    %109 = arith.index_cast %c3_i32 : i32 to index
    %110 = memref.load %arg1[%109] : memref<8xf32, #tpu.memory_space<smem>>
    %111 = vector.broadcast %110 : f32 to vector<1x512xf32>
    %112 = arith.mulf %111, %9 : vector<1x512xf32>
    %113 = arith.addf %112, %10 : vector<1x512xf32>
    %114 = arith.truncf %108 : vector<1x128xf32> to vector<1x128xbf16>
    %c0_33 = arith.constant 0 : index
    %c0_34 = arith.constant 0 : index
    %115 = vector.load %arg4[%c0_33, %c0_34] : memref<128x512xbf16, #tpu.memory_space<vmem>>, vector<128x512xbf16>
    %cst_35 = arith.constant dense<0.000000e+00> : vector<1x512xf32>
    %116 = tpu.matmul %114, %115, %cst_35 {dimension_numbers = #tpu.dot_dimension_numbers<[1], [0], [0], [1], [0, 0, 1, 1], [], []>} : vector<1x128xbf16>, vector<128x512xbf16>, vector<1x512xf32> -> vector<1x512xf32>
    %117 = arith.addf %113, %116 : vector<1x512xf32>
    %118 = arith.mulf %117, %8 : vector<1x512xf32>
    %119 = math.tanh %118 : vector<1x512xf32>
    %120 = vector.extract_strided_slice %119 {offsets = [0, 0], sizes = [1, 128], strides = [1, 1]} : vector<1x512xf32> to vector<1x128xf32>
    %cst_36 = arith.constant 1.000000e+00 : f32
    %121 = vector.broadcast %cst_36 : f32 to vector<1x128xf32>
    %122 = arith.addf %121, %120 : vector<1x128xf32>
    %cst_37 = arith.constant 5.000000e-01 : f32
    %123 = vector.broadcast %cst_37 : f32 to vector<1x128xf32>
    %124 = arith.mulf %123, %122 : vector<1x128xf32>
    %125 = vector.extract_strided_slice %119 {offsets = [0, 128], sizes = [1, 128], strides = [1, 1]} : vector<1x512xf32> to vector<1x128xf32>
    %cst_38 = arith.constant 1.000000e+00 : f32
    %126 = vector.broadcast %cst_38 : f32 to vector<1x128xf32>
    %127 = arith.addf %126, %125 : vector<1x128xf32>
    %cst_39 = arith.constant 5.000000e-01 : f32
    %128 = vector.broadcast %cst_39 : f32 to vector<1x128xf32>
    %129 = arith.mulf %128, %127 : vector<1x128xf32>
    %130 = vector.extract_strided_slice %119 {offsets = [0, 256], sizes = [1, 128], strides = [1, 1]} : vector<1x512xf32> to vector<1x128xf32>
    %131 = vector.extract_strided_slice %119 {offsets = [0, 384], sizes = [1, 128], strides = [1, 1]} : vector<1x512xf32> to vector<1x128xf32>
    %cst_40 = arith.constant 1.000000e+00 : f32
    %132 = vector.broadcast %cst_40 : f32 to vector<1x128xf32>
    %133 = arith.addf %132, %131 : vector<1x128xf32>
    %cst_41 = arith.constant 5.000000e-01 : f32
    %134 = vector.broadcast %cst_41 : f32 to vector<1x128xf32>
    %135 = arith.mulf %134, %133 : vector<1x128xf32>
    %136 = arith.mulf %129, %106 : vector<1x128xf32>
    %137 = arith.mulf %124, %130 : vector<1x128xf32>
    %138 = arith.addf %136, %137 : vector<1x128xf32>
    %139 = math.tanh %138 : vector<1x128xf32>
    %140 = arith.mulf %135, %139 : vector<1x128xf32>
    %c4_i32 = arith.constant 4 : i32
    %141 = arith.index_cast %c4_i32 : i32 to index
    %142 = memref.load %arg1[%141] : memref<8xf32, #tpu.memory_space<smem>>
    %143 = vector.broadcast %142 : f32 to vector<1x512xf32>
    %144 = arith.mulf %143, %9 : vector<1x512xf32>
    %145 = arith.addf %144, %10 : vector<1x512xf32>
    %146 = arith.truncf %140 : vector<1x128xf32> to vector<1x128xbf16>
    %c0_42 = arith.constant 0 : index
    %c0_43 = arith.constant 0 : index
    %147 = vector.load %arg4[%c0_42, %c0_43] : memref<128x512xbf16, #tpu.memory_space<vmem>>, vector<128x512xbf16>
    %cst_44 = arith.constant dense<0.000000e+00> : vector<1x512xf32>
    %148 = tpu.matmul %146, %147, %cst_44 {dimension_numbers = #tpu.dot_dimension_numbers<[1], [0], [0], [1], [0, 0, 1, 1], [], []>} : vector<1x128xbf16>, vector<128x512xbf16>, vector<1x512xf32> -> vector<1x512xf32>
    %149 = arith.addf %145, %148 : vector<1x512xf32>
    %150 = arith.mulf %149, %8 : vector<1x512xf32>
    %151 = math.tanh %150 : vector<1x512xf32>
    %152 = vector.extract_strided_slice %151 {offsets = [0, 0], sizes = [1, 128], strides = [1, 1]} : vector<1x512xf32> to vector<1x128xf32>
    %cst_45 = arith.constant 1.000000e+00 : f32
    %153 = vector.broadcast %cst_45 : f32 to vector<1x128xf32>
    %154 = arith.addf %153, %152 : vector<1x128xf32>
    %cst_46 = arith.constant 5.000000e-01 : f32
    %155 = vector.broadcast %cst_46 : f32 to vector<1x128xf32>
    %156 = arith.mulf %155, %154 : vector<1x128xf32>
    %157 = vector.extract_strided_slice %151 {offsets = [0, 128], sizes = [1, 128], strides = [1, 1]} : vector<1x512xf32> to vector<1x128xf32>
    %cst_47 = arith.constant 1.000000e+00 : f32
    %158 = vector.broadcast %cst_47 : f32 to vector<1x128xf32>
    %159 = arith.addf %158, %157 : vector<1x128xf32>
    %cst_48 = arith.constant 5.000000e-01 : f32
    %160 = vector.broadcast %cst_48 : f32 to vector<1x128xf32>
    %161 = arith.mulf %160, %159 : vector<1x128xf32>
    %162 = vector.extract_strided_slice %151 {offsets = [0, 256], sizes = [1, 128], strides = [1, 1]} : vector<1x512xf32> to vector<1x128xf32>
    %163 = vector.extract_strided_slice %151 {offsets = [0, 384], sizes = [1, 128], strides = [1, 1]} : vector<1x512xf32> to vector<1x128xf32>
    %cst_49 = arith.constant 1.000000e+00 : f32
    %164 = vector.broadcast %cst_49 : f32 to vector<1x128xf32>
    %165 = arith.addf %164, %163 : vector<1x128xf32>
    %cst_50 = arith.constant 5.000000e-01 : f32
    %166 = vector.broadcast %cst_50 : f32 to vector<1x128xf32>
    %167 = arith.mulf %166, %165 : vector<1x128xf32>
    %168 = arith.mulf %161, %138 : vector<1x128xf32>
    %169 = arith.mulf %156, %162 : vector<1x128xf32>
    %170 = arith.addf %168, %169 : vector<1x128xf32>
    %171 = math.tanh %170 : vector<1x128xf32>
    %172 = arith.mulf %167, %171 : vector<1x128xf32>
    %c5_i32 = arith.constant 5 : i32
    %173 = arith.index_cast %c5_i32 : i32 to index
    %174 = memref.load %arg1[%173] : memref<8xf32, #tpu.memory_space<smem>>
    %175 = vector.broadcast %174 : f32 to vector<1x512xf32>
    %176 = arith.mulf %175, %9 : vector<1x512xf32>
    %177 = arith.addf %176, %10 : vector<1x512xf32>
    %178 = arith.truncf %172 : vector<1x128xf32> to vector<1x128xbf16>
    %c0_51 = arith.constant 0 : index
    %c0_52 = arith.constant 0 : index
    %179 = vector.load %arg4[%c0_51, %c0_52] : memref<128x512xbf16, #tpu.memory_space<vmem>>, vector<128x512xbf16>
    %cst_53 = arith.constant dense<0.000000e+00> : vector<1x512xf32>
    %180 = tpu.matmul %178, %179, %cst_53 {dimension_numbers = #tpu.dot_dimension_numbers<[1], [0], [0], [1], [0, 0, 1, 1], [], []>} : vector<1x128xbf16>, vector<128x512xbf16>, vector<1x512xf32> -> vector<1x512xf32>
    %181 = arith.addf %177, %180 : vector<1x512xf32>
    %182 = arith.mulf %181, %8 : vector<1x512xf32>
    %183 = math.tanh %182 : vector<1x512xf32>
    %184 = vector.extract_strided_slice %183 {offsets = [0, 0], sizes = [1, 128], strides = [1, 1]} : vector<1x512xf32> to vector<1x128xf32>
    %cst_54 = arith.constant 1.000000e+00 : f32
    %185 = vector.broadcast %cst_54 : f32 to vector<1x128xf32>
    %186 = arith.addf %185, %184 : vector<1x128xf32>
    %cst_55 = arith.constant 5.000000e-01 : f32
    %187 = vector.broadcast %cst_55 : f32 to vector<1x128xf32>
    %188 = arith.mulf %187, %186 : vector<1x128xf32>
    %189 = vector.extract_strided_slice %183 {offsets = [0, 128], sizes = [1, 128], strides = [1, 1]} : vector<1x512xf32> to vector<1x128xf32>
    %cst_56 = arith.constant 1.000000e+00 : f32
    %190 = vector.broadcast %cst_56 : f32 to vector<1x128xf32>
    %191 = arith.addf %190, %189 : vector<1x128xf32>
    %cst_57 = arith.constant 5.000000e-01 : f32
    %192 = vector.broadcast %cst_57 : f32 to vector<1x128xf32>
    %193 = arith.mulf %192, %191 : vector<1x128xf32>
    %194 = vector.extract_strided_slice %183 {offsets = [0, 256], sizes = [1, 128], strides = [1, 1]} : vector<1x512xf32> to vector<1x128xf32>
    %195 = vector.extract_strided_slice %183 {offsets = [0, 384], sizes = [1, 128], strides = [1, 1]} : vector<1x512xf32> to vector<1x128xf32>
    %cst_58 = arith.constant 1.000000e+00 : f32
    %196 = vector.broadcast %cst_58 : f32 to vector<1x128xf32>
    %197 = arith.addf %196, %195 : vector<1x128xf32>
    %cst_59 = arith.constant 5.000000e-01 : f32
    %198 = vector.broadcast %cst_59 : f32 to vector<1x128xf32>
    %199 = arith.mulf %198, %197 : vector<1x128xf32>
    %200 = arith.mulf %193, %170 : vector<1x128xf32>
    %201 = arith.mulf %188, %194 : vector<1x128xf32>
    %202 = arith.addf %200, %201 : vector<1x128xf32>
    %203 = math.tanh %202 : vector<1x128xf32>
    %204 = arith.mulf %199, %203 : vector<1x128xf32>
    %c6_i32 = arith.constant 6 : i32
    %205 = arith.index_cast %c6_i32 : i32 to index
    %206 = memref.load %arg1[%205] : memref<8xf32, #tpu.memory_space<smem>>
    %207 = vector.broadcast %206 : f32 to vector<1x512xf32>
    %208 = arith.mulf %207, %9 : vector<1x512xf32>
    %209 = arith.addf %208, %10 : vector<1x512xf32>
    %210 = arith.truncf %204 : vector<1x128xf32> to vector<1x128xbf16>
    %c0_60 = arith.constant 0 : index
    %c0_61 = arith.constant 0 : index
    %211 = vector.load %arg4[%c0_60, %c0_61] : memref<128x512xbf16, #tpu.memory_space<vmem>>, vector<128x512xbf16>
    %cst_62 = arith.constant dense<0.000000e+00> : vector<1x512xf32>
    %212 = tpu.matmul %210, %211, %cst_62 {dimension_numbers = #tpu.dot_dimension_numbers<[1], [0], [0], [1], [0, 0, 1, 1], [], []>} : vector<1x128xbf16>, vector<128x512xbf16>, vector<1x512xf32> -> vector<1x512xf32>
    %213 = arith.addf %209, %212 : vector<1x512xf32>
    %214 = arith.mulf %213, %8 : vector<1x512xf32>
    %215 = math.tanh %214 : vector<1x512xf32>
    %216 = vector.extract_strided_slice %215 {offsets = [0, 0], sizes = [1, 128], strides = [1, 1]} : vector<1x512xf32> to vector<1x128xf32>
    %cst_63 = arith.constant 1.000000e+00 : f32
    %217 = vector.broadcast %cst_63 : f32 to vector<1x128xf32>
    %218 = arith.addf %217, %216 : vector<1x128xf32>
    %cst_64 = arith.constant 5.000000e-01 : f32
    %219 = vector.broadcast %cst_64 : f32 to vector<1x128xf32>
    %220 = arith.mulf %219, %218 : vector<1x128xf32>
    %221 = vector.extract_strided_slice %215 {offsets = [0, 128], sizes = [1, 128], strides = [1, 1]} : vector<1x512xf32> to vector<1x128xf32>
    %cst_65 = arith.constant 1.000000e+00 : f32
    %222 = vector.broadcast %cst_65 : f32 to vector<1x128xf32>
    %223 = arith.addf %222, %221 : vector<1x128xf32>
    %cst_66 = arith.constant 5.000000e-01 : f32
    %224 = vector.broadcast %cst_66 : f32 to vector<1x128xf32>
    %225 = arith.mulf %224, %223 : vector<1x128xf32>
    %226 = vector.extract_strided_slice %215 {offsets = [0, 256], sizes = [1, 128], strides = [1, 1]} : vector<1x512xf32> to vector<1x128xf32>
    %227 = vector.extract_strided_slice %215 {offsets = [0, 384], sizes = [1, 128], strides = [1, 1]} : vector<1x512xf32> to vector<1x128xf32>
    %cst_67 = arith.constant 1.000000e+00 : f32
    %228 = vector.broadcast %cst_67 : f32 to vector<1x128xf32>
    %229 = arith.addf %228, %227 : vector<1x128xf32>
    %cst_68 = arith.constant 5.000000e-01 : f32
    %230 = vector.broadcast %cst_68 : f32 to vector<1x128xf32>
    %231 = arith.mulf %230, %229 : vector<1x128xf32>
    %232 = arith.mulf %225, %202 : vector<1x128xf32>
    %233 = arith.mulf %220, %226 : vector<1x128xf32>
    %234 = arith.addf %232, %233 : vector<1x128xf32>
    %235 = math.tanh %234 : vector<1x128xf32>
    %236 = arith.mulf %231, %235 : vector<1x128xf32>
    %c7_i32 = arith.constant 7 : i32
    %237 = arith.index_cast %c7_i32 : i32 to index
    %238 = memref.load %arg1[%237] : memref<8xf32, #tpu.memory_space<smem>>
    %239 = vector.broadcast %238 : f32 to vector<1x512xf32>
    %240 = arith.mulf %239, %9 : vector<1x512xf32>
    %241 = arith.addf %240, %10 : vector<1x512xf32>
    %242 = arith.truncf %236 : vector<1x128xf32> to vector<1x128xbf16>
    %c0_69 = arith.constant 0 : index
    %c0_70 = arith.constant 0 : index
    %243 = vector.load %arg4[%c0_69, %c0_70] : memref<128x512xbf16, #tpu.memory_space<vmem>>, vector<128x512xbf16>
    %cst_71 = arith.constant dense<0.000000e+00> : vector<1x512xf32>
    %244 = tpu.matmul %242, %243, %cst_71 {dimension_numbers = #tpu.dot_dimension_numbers<[1], [0], [0], [1], [0, 0, 1, 1], [], []>} : vector<1x128xbf16>, vector<128x512xbf16>, vector<1x512xf32> -> vector<1x512xf32>
    %245 = arith.addf %241, %244 : vector<1x512xf32>
    %246 = arith.mulf %245, %8 : vector<1x512xf32>
    %247 = math.tanh %246 : vector<1x512xf32>
    %248 = vector.extract_strided_slice %247 {offsets = [0, 0], sizes = [1, 128], strides = [1, 1]} : vector<1x512xf32> to vector<1x128xf32>
    %cst_72 = arith.constant 1.000000e+00 : f32
    %249 = vector.broadcast %cst_72 : f32 to vector<1x128xf32>
    %250 = arith.addf %249, %248 : vector<1x128xf32>
    %cst_73 = arith.constant 5.000000e-01 : f32
    %251 = vector.broadcast %cst_73 : f32 to vector<1x128xf32>
    %252 = arith.mulf %251, %250 : vector<1x128xf32>
    %253 = vector.extract_strided_slice %247 {offsets = [0, 128], sizes = [1, 128], strides = [1, 1]} : vector<1x512xf32> to vector<1x128xf32>
    %cst_74 = arith.constant 1.000000e+00 : f32
    %254 = vector.broadcast %cst_74 : f32 to vector<1x128xf32>
    %255 = arith.addf %254, %253 : vector<1x128xf32>
    %cst_75 = arith.constant 5.000000e-01 : f32
    %256 = vector.broadcast %cst_75 : f32 to vector<1x128xf32>
    %257 = arith.mulf %256, %255 : vector<1x128xf32>
    %258 = vector.extract_strided_slice %247 {offsets = [0, 256], sizes = [1, 128], strides = [1, 1]} : vector<1x512xf32> to vector<1x128xf32>
    %259 = vector.extract_strided_slice %247 {offsets = [0, 384], sizes = [1, 128], strides = [1, 1]} : vector<1x512xf32> to vector<1x128xf32>
    %cst_76 = arith.constant 1.000000e+00 : f32
    %260 = vector.broadcast %cst_76 : f32 to vector<1x128xf32>
    %261 = arith.addf %260, %259 : vector<1x128xf32>
    %cst_77 = arith.constant 5.000000e-01 : f32
    %262 = vector.broadcast %cst_77 : f32 to vector<1x128xf32>
    %263 = arith.mulf %262, %261 : vector<1x128xf32>
    %264 = arith.mulf %257, %234 : vector<1x128xf32>
    %265 = arith.mulf %252, %258 : vector<1x128xf32>
    %266 = arith.addf %264, %265 : vector<1x128xf32>
    %267 = math.tanh %266 : vector<1x128xf32>
    %268 = arith.mulf %263, %267 : vector<1x128xf32>
    %c8_i32 = arith.constant 8 : i32
    %c0_78 = arith.constant 0 : index
    %c0_79 = arith.constant 0 : index
    %269 = vector.load %arg5[%c0_78, %c0_79] : memref<1x128xf32, #tpu.memory_space<vmem>>, vector<1x128xf32>
    %270 = arith.mulf %268, %269 : vector<1x128xf32>
    %cst_80 = arith.constant dense<0.000000e+00> : vector<1xf32>
    %271 = vector.multi_reduction <add>, %270, %cst_80 [1] : vector<1x128xf32> to vector<1xf32>
    %272 = vector.shape_cast %271 : vector<1xf32> to vector<1x1xf32>
    %c0_81 = arith.constant 0 : index
    %273 = memref.load %arg6[%c0_81] : memref<1xf32, #tpu.memory_space<smem>>
    %274 = vector.broadcast %273 : f32 to vector<1x1xf32>
    %275 = arith.addf %272, %274 : vector<1x1xf32>
    %c0_82 = arith.constant 0 : index
    %c0_83 = arith.constant 0 : index
    %276 = vector.load %arg7[%c0_82, %c0_83] : memref<1x1xf32, #tpu.memory_space<vmem>>, vector<1x1xf32>
    tpu.vector_store %arg7[%c0_82, %c0_83], %275 {strides = array<i32>} : memref<1x1xf32, #tpu.memory_space<vmem>>, vector<1x1xf32>,
    return
  }
  func.func @transform_0(%arg0: i32) -> i32 {
    %c0_i32 = arith.constant 0 : i32
    %c0_i32_0 = arith.constant 0 : i32
    return %c0_i32 : i32
  }
  func.func @transform_1(%arg0: i32) -> (i32, i32) {
    %c0_i32 = arith.constant 0 : i32
    %c0_i32_0 = arith.constant 0 : i32
    %c0_i32_1 = arith.constant 0 : i32
    return %c0_i32, %c0_i32_0 : i32, i32
  }
  func.func @transform_2(%arg0: i32) -> (i32, i32) {
    %c0_i32 = arith.constant 0 : i32
    %c0_i32_0 = arith.constant 0 : i32
    %c0_i32_1 = arith.constant 0 : i32
    return %c0_i32, %c0_i32_0 : i32, i32
  }
  func.func @transform_3(%arg0: i32) -> (i32, i32) {
    %c0_i32 = arith.constant 0 : i32
    %c0_i32_0 = arith.constant 0 : i32
    %c0_i32_1 = arith.constant 0 : i32
    return %c0_i32, %c0_i32_0 : i32, i32
  }
  func.func @transform_4(%arg0: i32) -> (i32, i32) {
    %c0_i32 = arith.constant 0 : i32
    %c0_i32_0 = arith.constant 0 : i32
    %c0_i32_1 = arith.constant 0 : i32
    return %c0_i32, %c0_i32_0 : i32, i32
  }
  func.func @transform_5(%arg0: i32) -> i32 {
    %c0_i32 = arith.constant 0 : i32
    %c0_i32_0 = arith.constant 0 : i32
    return %c0_i32 : i32
  }
  func.func @transform_6(%arg0: i32) -> (i32, i32) {
    %c0_i32 = arith.constant 0 : i32
    %c0_i32_0 = arith.constant 0 : i32
    %c0_i32_1 = arith.constant 0 : i32
    return %c0_i32, %c0_i32_0 : i32, i32
  }
}

</mosaic_0001>

<llo_original>
// kernel: tpu_custom_call.1
$region0: #{tpu_custom_call.1}
  #allocation0 [shape = 'u32[]', space=smem, size = 0x4, offset = 0x4, fixed_abs, tag = 'smem constant byte address 0x4 - core index']
  #allocation1 [shape = 'u32[144,128]{1,0:T(1,128)}', space=vmem, size = 0x12000, scoped, tag = 'internal scratch']
  #allocation2 [shape = 'f32[1]{0:T(128)S(6)}', space=smem, size = 0x200, scoped, tag = 'scoped memory for tpu_custom_call.1']
  %s0 = inlined_call_operand.vmem [shape: f32[8], index: 0, kind: input, shape index: {}]
  %s1 = inlined_call_operand.hbm [shape: f32[1,512], index: 1, kind: input, shape index: {}]
  %s2 = inlined_call_operand.vmem [shape: f32[1,512], index: 2, kind: input, shape index: {}]
  %s3 = inlined_call_operand.hbm [shape: bf16[128,512], index: 3, kind: input, shape index: {}]
  %s4 = inlined_call_operand.vmem [shape: f32[1,128], index: 4, kind: input, shape index: {}]
  %s5 = inlined_call_operand.<no memory space> [shape: f32[1], index: 5, kind: input, shape index: {}]
  %s6 = inlined_call_operand.hbm [shape: f32[1,1], index: 6, kind: output, shape index: {}]
  %s7 = sld [smem:[#allocation0]]
  $region46: #{tpu_custom_call.1} parent=0
    _
  %s9 = ssub.s32 1, %s7
  %s10 = scalar_select 0, %s9, %s7
  %11 = sst [smem:[#allocation2]] %s5
  $region1: #{tpu_custom_call.1} parent=0
    #allocation3 [shape = 'u8[512]{0}', space=smem, size = 0x200, scoped, tag = 'input window, operand 0, single buffered']
    #allocation4 [shape = 's32[1]{0}', space=sflag, size = 0x4, scoped, tag = 'scoped memory for tpu_custom_call.1']
    #allocation5 [shape = 's32[1]{0}', space=sflag, size = 0x4, scoped, tag = 'scoped memory for tpu_custom_call.1']
    #allocation6 [shape = 's32[1]{0}', space=sflag, size = 0x4, scoped, tag = 'scoped memory for tpu_custom_call.1']
    #allocation7 [shape = 'u8[2048]{0}', space=vmem, size = 0x800, scoped, tag = 'input window, operand 1, single buffered']
    #allocation8 [shape = 'u8[131072]{0}', space=vmem, size = 0x20000, scoped, tag = 'input window, operand 3, single buffered']
    #allocation9 [shape = 's32[1]{0}', space=sflag, size = 0x4, scoped, tag = 'scoped memory for tpu_custom_call.1']
    #allocation10 [shape = 'u8[512]{0}', space=vmem, size = 0x400, scoped, tag = 'output window, operand 0, single buffered']
    %12 = vsyncpa [#allocation6], 0
    %13 = vsyncpa [#allocation4], 0
    %14 = vsyncpa [#allocation9], 0
    %15 = vsyncpa [#allocation5], 0
    // Predicated region
    $region2: #{tpu_custom_call.1} parent=1 // pred_check
      _
    $region3: #{tpu_custom_call.1} parent=1 // pred_check_branch
      %17 = sbr.rel (0) target = $region5
    $region4: #{tpu_custom_call.1} parent=1 // pred_region
      %s19 = ssub.s32 16, 16
      %20 = vsyncadd [#allocation6], %s19
      %s22 = sshll.u32 %s0, 4
      %s23 = int_to_ptr.vmem [resolvable:$true] %s22
      %25 = dma.vmem_to_smem %s23, 16, [#allocation3], [#allocation6]
    $region5: #{tpu_custom_call.1} parent=1 // pred_fallthru
      _
    // Predicated region
    $region6: #{tpu_custom_call.1} parent=1 // pred_check
      _
    $region7: #{tpu_custom_call.1} parent=1 // pred_check_branch
      %27 = sbr.rel (0) target = $region9
    $region8: #{tpu_custom_call.1} parent=1 // pred_region
      %s29 = ssub.s32 64, 64
      %30 = vsyncadd [#allocation4], %s29
      %s32 = sshll.u32 [#allocation7], 4
      %s33 = int_to_ptr.vmem [resolvable:$true] %s32
      %35 = dma.hbm_to_vmem [thread:$0]  %s1, 64, %s33, [#allocation4]
    $region9: #{tpu_custom_call.1} parent=1 // pred_fallthru
      _
    // Predicated region
    $region10: #{tpu_custom_call.1} parent=1 // pred_check
      _
    $region11: #{tpu_custom_call.1} parent=1 // pred_check_branch
      %37 = sbr.rel (0) target = $region13
    $region12: #{tpu_custom_call.1} parent=1 // pred_region
      _
    $region13: #{tpu_custom_call.1} parent=1 // pred_fallthru
      _
    // Predicated region
    $region14: #{tpu_custom_call.1} parent=1 // pred_check
      _
    $region15: #{tpu_custom_call.1} parent=1 // pred_check_branch
      %39 = sbr.rel (0) target = $region17
    $region16: #{tpu_custom_call.1} parent=1 // pred_region
      %s41 = ssub.s32 4096, 4096
      %42 = vsyncadd [#allocation9], %s41
      %s43 = sshll.u32 [#allocation8], 4
      %s44 = int_to_ptr.vmem [resolvable:$true] %s43
      %49 = dma.hbm_to_vmem [thread:$0]  %s3, 4096, %s44, [#allocation9], 256, 256, 16
    $region17: #{tpu_custom_call.1} parent=1 // pred_fallthru
      _
    // Predicated region
    $region18: #{tpu_custom_call.1} parent=1 // pred_check
      _
    $region19: #{tpu_custom_call.1} parent=1 // pred_check_branch
      %51 = sbr.rel (0) target = $region21
    $region20: #{tpu_custom_call.1} parent=1 // pred_region
      _
    $region21: #{tpu_custom_call.1} parent=1 // pred_fallthru
      _
    // Predicated region
    $region22: #{tpu_custom_call.1} parent=1 // pred_check
      _
    $region23: #{tpu_custom_call.1} parent=1 // pred_check_branch
      %53 = sbr.rel (0) target = $region25
    $region24: #{tpu_custom_call.1} parent=1 // pred_region
      _
    $region25: #{tpu_custom_call.1} parent=1 // pred_fallthru
      _
    // Predicated region
    $region26: #{tpu_custom_call.1} parent=1 // pred_check
      _
    $region27: #{tpu_custom_call.1} parent=1 // pred_check_branch
      %55 = sbr.rel (0) target = $region29
    $region28: #{tpu_custom_call.1} parent=1 // pred_region
      %56 = dma.done [#allocation6], 16
    $region29: #{tpu_custom_call.1} parent=1 // pred_fallthru
      _
    // Predicated region
    $region30: #{tpu_custom_call.1} parent=1 // pred_check
      _
    $region31: #{tpu_custom_call.1} parent=1 // pred_check_branch
      %58 = sbr.rel (0) target = $region33
    $region32: #{tpu_custom_call.1} parent=1 // pred_region
      %59 = dma.done [#allocation4], 64
    $region33: #{tpu_custom_call.1} parent=1 // pred_fallthru
      _
    // Predicated region
    $region34: #{tpu_custom_call.1} parent=1 // pred_check
      _
    $region35: #{tpu_custom_call.1} parent=1 // pred_check_branch
      %61 = sbr.rel (0) target = $region37
    $region36: #{tpu_custom_call.1} parent=1 // pred_region
      %62 = dma.done [#allocation9], 4096
    $region37: #{tpu_custom_call.1} parent=1 // pred_fallthru
      _
    %63 = sfence
    %v65 = vlaneseq
    %v66 = vand.u32 %v65, 127
    %v67 = vadd.s32 %v66, 128
    %v68 = vadd.s32 %v66, 256
    %v69 = vadd.s32 %v66, 384
    %vm70 = vcmp.ge.s32.totalorder %v66, 256
    %vm71 = vcmp.ge.s32.totalorder %v67, 256
    %vm72 = vcmp.ge.s32.totalorder %v68, 256
    %vm73 = vcmp.ge.s32.totalorder %v69, 256
    %vm74 = vcmp.lt.s32.totalorder %v66, 384
    %vm75 = vcmp.lt.s32.totalorder %v67, 384
    %vm76 = vcmp.lt.s32.totalorder %v68, 384
    %vm77 = vcmp.lt.s32.totalorder %v69, 384
    %vm78 = vmand %vm70, %vm74
    %vm79 = vmand %vm71, %vm75
    %vm80 = vmand %vm72, %vm76
    %vm81 = vmand %vm73, %vm77
    %v82 = vsel %vm78, 1.0, 0.5
    %v83 = vsel %vm79, 1.0, 0.5
    %v84 = vsel %vm80, 1.0, 0.5
    %v85 = vsel %vm81, 1.0, 0.5
    %v86 = vld [vmem:[#allocation7] sm:$0xf]
    %v87 = vld [vmem:[%s2] sm:$0xf]
    %s88 = sld [smem:[#allocation3]]
    %v89 = vstv %s88
    %v90 = vmul.f32 %v89, %v86
    %v91 = vadd.f32 %v90, %v87
    %v92 = vld [vmem:[#allocation8] sm:$0xff]
    %v93 = vld [vmem:[#allocation8 + $0x8] sm:$0xff]
    %v94 = vld [vmem:[#allocation8 + $0x10] sm:$0xff]
    %v95 = vld [vmem:[#allocation8 + $0x18] sm:$0xff]
    %v96 = vld [vmem:[#allocation8 + $0x20] sm:$0xff]
    %v97 = vld [vmem:[#allocation8 + $0x28] sm:$0xff]
    %v98 = vld [vmem:[#allocation8 + $0x30] sm:$0xff]
    %v99 = vld [vmem:[#allocation8 + $0x38] sm:$0xff]
    %v100 = vld [vmem:[#allocation8 + $0x40] sm:$0xff]
    %v101 = vld [vmem:[#allocation8 + $0x48] sm:$0xff]
    %v102 = vld [vmem:[#allocation8 + $0x50] sm:$0xff]
    %v103 = vld [vmem:[#allocation8 + $0x58] sm:$0xff]
    %v104 = vld [vmem:[#allocation8 + $0x60] sm:$0xff]
    %v105 = vld [vmem:[#allocation8 + $0x68] sm:$0xff]
    %v106 = vld [vmem:[#allocation8 + $0x70] sm:$0xff]
    %v107 = vld [vmem:[#allocation8 + $0x78] sm:$0xff]
    %v108 = vld [vmem:[#allocation8 + $0x80] sm:$0xff]
    %v109 = vld [vmem:[#allocation8 + $0x88] sm:$0xff]
    %v110 = vld [vmem:[#allocation8 + $0x90] sm:$0xff]
    %v111 = vld [vmem:[#allocation8 + $0x98] sm:$0xff]
    %v112 = vld [vmem:[#allocation8 + $0xa0] sm:$0xff]
    %v113 = vld [vmem:[#allocation8 + $0xa8] sm:$0xff]
    %v114 = vld [vmem:[#allocation8 + $0xb0] sm:$0xff]
    %v115 = vld [vmem:[#allocation8 + $0xb8] sm:$0xff]
    %v116 = vld [vmem:[#allocation8 + $0xc0] sm:$0xff]
    %v117 = vld [vmem:[#allocation8 + $0xc8] sm:$0xff]
    %v118 = vld [vmem:[#allocation8 + $0xd0] sm:$0xff]
    %v119 = vld [vmem:[#allocation8 + $0xd8] sm:$0xff]
    %v120 = vld [vmem:[#allocation8 + $0xe0] sm:$0xff]
    %v121 = vld [vmem:[#allocation8 + $0xe8] sm:$0xff]
    %v122 = vld [vmem:[#allocation8 + $0xf0] sm:$0xff]
    %v123 = vld [vmem:[#allocation8 + $0xf8] sm:$0xff]
    %v156 = vunpack.c.l.b16 %v92
    %v157 = vunpack.c.h.b16 %v92
    %v158 = vunpack.c.l.b16 %v93
    %v159 = vunpack.c.h.b16 %v93
    %v160 = vunpack.c.l.b16 %v94
    %v161 = vunpack.c.h.b16 %v94
    %v162 = vunpack.c.l.b16 %v95
    %v163 = vunpack.c.h.b16 %v95
    %v164 = vunpack.c.l.b16 %v96
    %v165 = vunpack.c.h.b16 %v96
    %v166 = vunpack.c.l.b16 %v97
    %v167 = vunpack.c.h.b16 %v97
    %v168 = vunpack.c.l.b16 %v98
    %v169 = vunpack.c.h.b16 %v98
    %v170 = vunpack.c.l.b16 %v99
    %v171 = vunpack.c.h.b16 %v99
    %v172 = vunpack.c.l.b16 %v100
    %v173 = vunpack.c.h.b16 %v100
    %v174 = vunpack.c.l.b16 %v101
    %v175 = vunpack.c.h.b16 %v101
    %v176 = vunpack.c.l.b16 %v102
    %v177 = vunpack.c.h.b16 %v102
    %v178 = vunpack.c.l.b16 %v103
    %v179 = vunpack.c.h.b16 %v103
    %v180 = vunpack.c.l.b16 %v104
    %v181 = vunpack.c.h.b16 %v104
    %v182 = vunpack.c.l.b16 %v105
    %v183 = vunpack.c.h.b16 %v105
    %v184 = vunpack.c.l.b16 %v106
    %v185 = vunpack.c.h.b16 %v106
    %v186 = vunpack.c.l.b16 %v107
    %v187 = vunpack.c.h.b16 %v107
    %v188 = vunpack.c.l.b16 %v108
    %v189 = vunpack.c.h.b16 %v108
    %v190 = vunpack.c.l.b16 %v109
    %v191 = vunpack.c.h.b16 %v109
    %v192 = vunpack.c.l.b16 %v110
    %v193 = vunpack.c.h.b16 %v110
    %v194 = vunpack.c.l.b16 %v111
    %v195 = vunpack.c.h.b16 %v111
    %v196 = vunpack.c.l.b16 %v112
    %v197 = vunpack.c.h.b16 %v112
    %v198 = vunpack.c.l.b16 %v113
    %v199 = vunpack.c.h.b16 %v113
    %v200 = vunpack.c.l.b16 %v114
    %v201 = vunpack.c.h.b16 %v114
    %v202 = vunpack.c.l.b16 %v115
    %v203 = vunpack.c.h.b16 %v115
    %v204 = vunpack.c.l.b16 %v116
    %v205 = vunpack.c.h.b16 %v116
    %v206 = vunpack.c.l.b16 %v117
    %v207 = vunpack.c.h.b16 %v117
    %v208 = vunpack.c.l.b16 %v118
    %v209 = vunpack.c.h.b16 %v118
    %v210 = vunpack.c.l.b16 %v119
    %v211 = vunpack.c.h.b16 %v119
    %v212 = vunpack.c.l.b16 %v120
    %v213 = vunpack.c.h.b16 %v120
    %v214 = vunpack.c.l.b16 %v121
    %v215 = vunpack.c.h.b16 %v121
    %v216 = vunpack.c.l.b16 %v122
    %v217 = vunpack.c.h.b16 %v122
    %v218 = vunpack.c.l.b16 %v123
    %v219 = vunpack.c.h.b16 %v123
    %v220 = vpack.c.b16 %v160, %v156
    %v221 = vpack.c.b16 %v161, %v157
    %v222 = vpack.c.b16 %v162, %v158
    %v223 = vpack.c.b16 %v163, %v159
    %v224 = vpack.c.b16 %v168, %v164
    %v225 = vpack.c.b16 %v169, %v165
    %v226 = vpack.c.b16 %v170, %v166
    %v227 = vpack.c.b16 %v171, %v167
    %v228 = vpack.c.b16 %v176, %v172
    %v229 = vpack.c.b16 %v177, %v173
    %v230 = vpack.c.b16 %v178, %v174
    %v231 = vpack.c.b16 %v179, %v175
    %v232 = vpack.c.b16 %v184, %v180
    %v233 = vpack.c.b16 %v185, %v181
    %v234 = vpack.c.b16 %v186, %v182
    %v235 = vpack.c.b16 %v187, %v183
    %v236 = vpack.c.b16 %v192, %v188
    %v237 = vpack.c.b16 %v193, %v189
    %v238 = vpack.c.b16 %v194, %v190
    %v239 = vpack.c.b16 %v195, %v191
    %v240 = vpack.c.b16 %v200, %v196
    %v241 = vpack.c.b16 %v201, %v197
    %v242 = vpack.c.b16 %v202, %v198
    %v243 = vpack.c.b16 %v203, %v199
    %v244 = vpack.c.b16 %v208, %v204
    %v245 = vpack.c.b16 %v209, %v205
    %v246 = vpack.c.b16 %v210, %v206
    %v247 = vpack.c.b16 %v211, %v207
    %v248 = vpack.c.b16 %v216, %v212
    %v249 = vpack.c.b16 %v217, %v213
    %v250 = vpack.c.b16 %v218, %v214
    %v251 = vpack.c.b16 %v219, %v215
    %284 = vmatprep.subr.bf16.mxu0 %v249
    %285 = vmatpush1.bf16.msra.mxu0 %v248
    %286 = vmatprep.subr.bf16.mxu0 %v245
    %287 = vmatpush1.bf16.msra.mxu0 %v244
    %288 = vmatprep.subr.bf16.mxu0 %v241
    %289 = vmatpush1.bf16.msra.mxu0 %v240
    %290 = vmatprep.subr.bf16.mxu0 %v237
    %291 = vmatpush1.bf16.msra.mxu0 %v236
    %292 = vmatprep.subr.bf16.mxu0 %v233
    %293 = vmatpush1.bf16.msra.mxu0 %v232
    %294 = vmatprep.subr.bf16.mxu0 %v229
    %295 = vmatpush1.bf16.msra.mxu0 %v228
    %296 = vmatprep.subr.bf16.mxu0 %v225
    %297 = vmatpush1.bf16.msra.mxu0 %v224
    %298 = vmatprep.subr.bf16.mxu0 %v221
    %299 = vmatpush1.bf16.msra.mxu0 %v220
    %300 = vmatprep.subr.bf16.mxu0 0
    %301 = vmatpush2.bf16.msra.mxu0 0
    %302 = vmatprep.subr.bf16.mxu0 0
    %303 = vmatpush2.bf16.msra.mxu0 0
    %304 = vmatprep.subr.bf16.mxu0 0
    %305 = vmatpush2.bf16.msra.mxu0 0
    %306 = vmatprep.subr.bf16.mxu0 0
    %307 = vmatpush2.bf16.msra.mxu0 0
    %308 = vmatprep.subr.bf16.mxu0 0
    %309 = vmatpush2.bf16.msra.mxu0 0
    %310 = vmatprep.subr.bf16.mxu0 0
    %311 = vmatpush2.bf16.msra.mxu0 0
    %312 = vmatprep.subr.bf16.mxu0 0
    %313 = vmatpush2.bf16.msra.mxu0 0
    %314 = vmatprep.subr.bf16.mxu0 0
    %315 = vmatpush2.bf16.msra.mxu0 0
    %316 = vmatprep.mubr.bf16.mxu0 0
    %317 = vmatmul.mubr.bf16.gmra.mxu0 0
    %v318 = vpop.f32.mrf.mxu0
    %v319 = vadd.f32 0.0, %v318
    %v320 = vpop.f32.mrf.mxu0
    %v321 = vadd.f32 0.0, %v320
    %v322 = vpop.f32.mrf.mxu0
    %v323 = vpop.f32.mrf.mxu0
    %324 = vdwg.mxu0
    %325 = vmatprep.subr.bf16.mxu0 %v251
    %326 = vmatpush1.bf16.msra.mxu0 %v250
    %327 = vmatprep.subr.bf16.mxu0 %v247
    %328 = vmatpush1.bf16.msra.mxu0 %v246
    %329 = vmatprep.subr.bf16.mxu0 %v243
    %330 = vmatpush1.bf16.msra.mxu0 %v242
    %331 = vmatprep.subr.bf16.mxu0 %v239
    %332 = vmatpush1.bf16.msra.mxu0 %v238
    %333 = vmatprep.subr.bf16.mxu0 %v235
    %334 = vmatpush1.bf16.msra.mxu0 %v234
    %335 = vmatprep.subr.bf16.mxu0 %v231
    %336 = vmatpush1.bf16.msra.mxu0 %v230
    %337 = vmatprep.subr.bf16.mxu0 %v227
    %338 = vmatpush1.bf16.msra.mxu0 %v226
    %339 = vmatprep.subr.bf16.mxu0 %v223
    %340 = vmatpush1.bf16.msra.mxu0 %v222
    %341 = vmatprep.subr.bf16.mxu0 0
    %342 = vmatpush2.bf16.msra.mxu0 0
    %343 = vmatprep.subr.bf16.mxu0 0
    %344 = vmatpush2.bf16.msra.mxu0 0
    %345 = vmatprep.subr.bf16.mxu0 0
    %346 = vmatpush2.bf16.msra.mxu0 0
    %347 = vmatprep.subr.bf16.mxu0 0
    %348 = vmatpush2.bf16.msra.mxu0 0
    %349 = vmatprep.subr.bf16.mxu0 0
    %350 = vmatpush2.bf16.msra.mxu0 0
    %351 = vmatprep.subr.bf16.mxu0 0
    %352 = vmatpush2.bf16.msra.mxu0 0
    %353 = vmatprep.subr.bf16.mxu0 0
    %354 = vmatpush2.bf16.msra.mxu0 0
    %355 = vmatprep.subr.bf16.mxu0 0
    %356 = vmatpush2.bf16.msra.mxu0 0
    %357 = vmatprep.mubr.bf16.mxu0 0
    %358 = vmatmul.mubr.bf16.gmra.mxu0 0
    %v359 = vpop.f32.mrf.mxu0
    %v360 = vadd.f32 0.0, %v359
    %v361 = vpop.f32.mrf.mxu0
    %v362 = vadd.f32 0.0, %v361
    %v363 = vpop.f32.mrf.mxu0
    %v364 = vpop.f32.mrf.mxu0
    %365 = vdwg.mxu0
    %v370 = vcombine.low %v319, %v321
    %v371 = vcombine.low %v360, %v362
    %v373 = vunpack.c.l.s4 1966171168
    %v374 = vunpack.c.0.s8 %v373
    %v375 = vlaneseq
    %v376 = vshrl.u32 %v375, 7
    %v377 = vsub.s32 %v374, %v376
    %v378 = vrot.slane %v370, %v377
    %v380 = vunpack.c.l.s4 1966171168
    %v381 = vunpack.c.0.s8 %v380
    %v382 = vlaneseq
    %v383 = vshrl.u32 %v382, 7
    %v384 = vsub.s32 %v381, %v383
    %v385 = vrot.slane %v371, %v384
    %v386 = vcombine.low %v378, %v385
    %v388 = vunpack.c.l.s4 1966171168
    %v389 = vunpack.c.0.s8 %v388
    %v390 = vlaneseq
    %v391 = vshrl.u32 %v390, 7
    %v392 = vsub.s32 %v389, %v391
    %v393 = vrot.slane %v386, %v392
    %v395 = vadd.f32 %v91, %v393
    %v400 = vcombine.low %v82, %v83
    %v401 = vcombine.low %v84, %v85
    %v403 = vunpack.c.l.s4 1966171168
    %v404 = vunpack.c.0.s8 %v403
    %v405 = vlaneseq
    %v406 = vshrl.u32 %v405, 7
    %v407 = vsub.s32 %v404, %v406
    %v408 = vrot.slane %v400, %v407
    %v410 = vunpack.c.l.s4 1966171168
    %v411 = vunpack.c.0.s8 %v410
    %v412 = vlaneseq
    %v413 = vshrl.u32 %v412, 7
    %v414 = vsub.s32 %v411, %v413
    %v415 = vrot.slane %v401, %v414
    %v416 = vcombine.low %v408, %v415
    %v418 = vunpack.c.l.s4 1966171168
    %v419 = vunpack.c.0.s8 %v418
    %v420 = vlaneseq
    %v421 = vshrl.u32 %v420, 7
    %v422 = vsub.s32 %v419, %v421
    %v423 = vrot.slane %v416, %v422
    %v425 = vmul.f32 %v395, %v423
    %v426 = vtanh.pop %v425
    %v427 = vadd.f32 %v426, 1.0
    %v428 = vmul.f32 %v427, 0.5
    %v430 = vrot.slane %v426, 1
    %v432 = vadd.f32 %v430, 1.0
    %v433 = vmul.f32 %v432, 0.5
    %v434 = vrot.slane %v426, 3
    %v436 = vadd.f32 %v434, 1.0
    %v437 = vmul.f32 %v436, 0.5
    %v438 = vmul.f32 %v433, 0.0
    %v439 = vrot.slane %v426, 2
    %v441 = vmul.f32 %v428, %v439
    %v442 = vadd.f32 %v438, %v441
    %v443 = vtanh.pop %v442
    %v444 = vmul.f32 %v437, %v443
    %s445 = sld [smem:[#allocation3 + $0x1]]
    %v446 = vstv %s445
    %v447 = vmul.f32 %v446, %v86
    %v448 = vadd.f32 %v447, %v87
    %v449 = vpack.c.bf16 %v444, %v444
    %450 = vmatprep.subr.bf16.mxu0 %v249
    %451 = vmatpush1.bf16.msra.mxu0 %v248
    %452 = vmatprep.subr.bf16.mxu0 %v245
    %453 = vmatpush1.bf16.msra.mxu0 %v244
    %454 = vmatprep.subr.bf16.mxu0 %v241
    %455 = vmatpush1.bf16.msra.mxu0 %v240
    %456 = vmatprep.subr.bf16.mxu0 %v237
    %457 = vmatpush1.bf16.msra.mxu0 %v236
    %458 = vmatprep.subr.bf16.mxu0 %v233
    %459 = vmatpush1.bf16.msra.mxu0 %v232
    %460 = vmatprep.subr.bf16.mxu0 %v229
    %461 = vmatpush1.bf16.msra.mxu0 %v228
    %462 = vmatprep.subr.bf16.mxu0 %v225
    %463 = vmatpush1.bf16.msra.mxu0 %v224
    %464 = vmatprep.subr.bf16.mxu0 %v221
    %465 = vmatpush1.bf16.msra.mxu0 %v220
    %466 = vmatprep.subr.bf16.mxu0 0
    %467 = vmatpush2.bf16.msra.mxu0 0
    %468 = vmatprep.subr.bf16.mxu0 0
    %469 = vmatpush2.bf16.msra.mxu0 0
    %470 = vmatprep.subr.bf16.mxu0 0
    %471 = vmatpush2.bf16.msra.mxu0 0
    %472 = vmatprep.subr.bf16.mxu0 0
    %473 = vmatpush2.bf16.msra.mxu0 0
    %474 = vmatprep.subr.bf16.mxu0 0
    %475 = vmatpush2.bf16.msra.mxu0 0
    %476 = vmatprep.subr.bf16.mxu0 0
    %477 = vmatpush2.bf16.msra.mxu0 0
    %478 = vmatprep.subr.bf16.mxu0 0
    %479 = vmatpush2.bf16.msra.mxu0 0
    %480 = vmatprep.subr.bf16.mxu0 0
    %481 = vmatpush2.bf16.msra.mxu0 0
    %482 = vmatprep.mubr.bf16.mxu0 0
    %483 = vmatmul.mubr.bf16.gmra.mxu0 %v449
    %v484 = vpop.f32.mrf.mxu0
    %v485 = vadd.f32 0.0, %v484
    %v486 = vpop.f32.mrf.mxu0
    %v487 = vadd.f32 0.0, %v486
    %v488 = vpop.f32.mrf.mxu0
    %v489 = vpop.f32.mrf.mxu0
    %490 = vdwg.mxu0
    %491 = vmatprep.subr.bf16.mxu0 %v251
    %492 = vmatpush1.bf16.msra.mxu0 %v250
    %493 = vmatprep.subr.bf16.mxu0 %v247
    %494 = vmatpush1.bf16.msra.mxu0 %v246
    %495 = vmatprep.subr.bf16.mxu0 %v243
    %496 = vmatpush1.bf16.msra.mxu0 %v242
    %497 = vmatprep.subr.bf16.mxu0 %v239
    %498 = vmatpush1.bf16.msra.mxu0 %v238
    %499 = vmatprep.subr.bf16.mxu0 %v235
    %500 = vmatpush1.bf16.msra.mxu0 %v234
    %501 = vmatprep.subr.bf16.mxu0 %v231
    %502 = vmatpush1.bf16.msra.mxu0 %v230
    %503 = vmatprep.subr.bf16.mxu0 %v227
    %504 = vmatpush1.bf16.msra.mxu0 %v226
    %505 = vmatprep.subr.bf16.mxu0 %v223
    %506 = vmatpush1.bf16.msra.mxu0 %v222
    %507 = vmatprep.subr.bf16.mxu0 0
    %508 = vmatpush2.bf16.msra.mxu0 0
    %509 = vmatprep.subr.bf16.mxu0 0
    %510 = vmatpush2.bf16.msra.mxu0 0
    %511 = vmatprep.subr.bf16.mxu0 0
    %512 = vmatpush2.bf16.msra.mxu0 0
    %513 = vmatprep.subr.bf16.mxu0 0
    %514 = vmatpush2.bf16.msra.mxu0 0
    %515 = vmatprep.subr.bf16.mxu0 0
    %516 = vmatpush2.bf16.msra.mxu0 0
    %517 = vmatprep.subr.bf16.mxu0 0
    %518 = vmatpush2.bf16.msra.mxu0 0
    %519 = vmatprep.subr.bf16.mxu0 0
    %520 = vmatpush2.bf16.msra.mxu0 0
    %521 = vmatprep.subr.bf16.mxu0 0
    %522 = vmatpush2.bf16.msra.mxu0 0
    %523 = vmatprep.mubr.bf16.mxu0 0
    %524 = vmatmul.mubr.bf16.gmra.mxu0 %v449
    %v525 = vpop.f32.mrf.mxu0
    %v526 = vadd.f32 0.0, %v525
    %v527 = vpop.f32.mrf.mxu0
    %v528 = vadd.f32 0.0, %v527
    %v529 = vpop.f32.mrf.mxu0
    %v530 = vpop.f32.mrf.mxu0
    %531 = vdwg.mxu0
    %v536 = vcombine.low %v485, %v487
    %v537 = vcombine.low %v526, %v528
    %v539 = vunpack.c.l.s4 1966171168
    %v540 = vunpack.c.0.s8 %v539
    %v541 = vlaneseq
    %v542 = vshrl.u32 %v541, 7
    %v543 = vsub.s32 %v540, %v542
    %v544 = vrot.slane %v536, %v543
    %v546 = vunpack.c.l.s4 1966171168
    %v547 = vunpack.c.0.s8 %v546
    %v548 = vlaneseq
    %v549 = vshrl.u32 %v548, 7
    %v550 = vsub.s32 %v547, %v549
    %v551 = vrot.slane %v537, %v550
    %v552 = vcombine.low %v544, %v551
    %v554 = vunpack.c.l.s4 1966171168
    %v555 = vunpack.c.0.s8 %v554
    %v556 = vlaneseq
    %v557 = vshrl.u32 %v556, 7
    %v558 = vsub.s32 %v555, %v557
    %v559 = vrot.slane %v552, %v558
    %v561 = vadd.f32 %v448, %v559
    %v562 = vmul.f32 %v561, %v423
    %v563 = vtanh.pop %v562
    %v564 = vadd.f32 %v563, 1.0
    %v565 = vmul.f32 %v564, 0.5
    %v567 = vrot.slane %v563, 1
    %v569 = vadd.f32 %v567, 1.0
    %v570 = vmul.f32 %v569, 0.5
    %v571 = vrot.slane %v563, 3
    %v573 = vadd.f32 %v571, 1.0
    %v574 = vmul.f32 %v573, 0.5
    %v575 = vmul.f32 %v570, %v442
    %v576 = vrot.slane %v563, 2
    %v578 = vmul.f32 %v565, %v576
    %v579 = vadd.f32 %v575, %v578
    %v580 = vtanh.pop %v579
    %v581 = vmul.f32 %v574, %v580
    %s582 = sld [smem:[#allocation3 + $0x2]]
    %v583 = vstv %s582
    %v584 = vmul.f32 %v583, %v86
    %v585 = vadd.f32 %v584, %v87
    %v586 = vpack.c.bf16 %v581, %v581
    %587 = vmatprep.subr.bf16.mxu0 %v249
    %588 = vmatpush1.bf16.msra.mxu0 %v248
    %589 = vmatprep.subr.bf16.mxu0 %v245
    %590 = vmatpush1.bf16.msra.mxu0 %v244
    %591 = vmatprep.subr.bf16.mxu0 %v241
    %592 = vmatpush1.bf16.msra.mxu0 %v240
    %593 = vmatprep.subr.bf16.mxu0 %v237
    %594 = vmatpush1.bf16.msra.mxu0 %v236
    %595 = vmatprep.subr.bf16.mxu0 %v233
    %596 = vmatpush1.bf16.msra.mxu0 %v232
    %597 = vmatprep.subr.bf16.mxu0 %v229
    %598 = vmatpush1.bf16.msra.mxu0 %v228
    %599 = vmatprep.subr.bf16.mxu0 %v225
    %600 = vmatpush1.bf16.msra.mxu0 %v224
    %601 = vmatprep.subr.bf16.mxu0 %v221
    %602 = vmatpush1.bf16.msra.mxu0 %v220
    %603 = vmatprep.subr.bf16.mxu0 0
    %604 = vmatpush2.bf16.msra.mxu0 0
    %605 = vmatprep.subr.bf16.mxu0 0
    %606 = vmatpush2.bf16.msra.mxu0 0
    %607 = vmatprep.subr.bf16.mxu0 0
    %608 = vmatpush2.bf16.msra.mxu0 0
    %609 = vmatprep.subr.bf16.mxu0 0
    %610 = vmatpush2.bf16.msra.mxu0 0
    %611 = vmatprep.subr.bf16.mxu0 0
    %612 = vmatpush2.bf16.msra.mxu0 0
    %613 = vmatprep.subr.bf16.mxu0 0
    %614 = vmatpush2.bf16.msra.mxu0 0
    %615 = vmatprep.subr.bf16.mxu0 0
    %616 = vmatpush2.bf16.msra.mxu0 0
    %617 = vmatprep.subr.bf16.mxu0 0
    %618 = vmatpush2.bf16.msra.mxu0 0
    %619 = vmatprep.mubr.bf16.mxu0 0
    %620 = vmatmul.mubr.bf16.gmra.mxu0 %v586
    %v621 = vpop.f32.mrf.mxu0
    %v622 = vadd.f32 0.0, %v621
    %v623 = vpop.f32.mrf.mxu0
    %v624 = vadd.f32 0.0, %v623
    %v625 = vpop.f32.mrf.mxu0
    %v626 = vpop.f32.mrf.mxu0
    %627 = vdwg.mxu0
    %628 = vmatprep.subr.bf16.mxu0 %v251
    %629 = vmatpush1.bf16.msra.mxu0 %v250
    %630 = vmatprep.subr.bf16.mxu0 %v247
    %631 = vmatpush1.bf16.msra.mxu0 %v246
    %632 = vmatprep.subr.bf16.mxu0 %v243
    %633 = vmatpush1.bf16.msra.mxu0 %v242
    %634 = vmatprep.subr.bf16.mxu0 %v239
    %635 = vmatpush1.bf16.msra.mxu0 %v238
    %636 = vmatprep.subr.bf16.mxu0 %v235
    %637 = vmatpush1.bf16.msra.mxu0 %v234
    %638 = vmatprep.subr.bf16.mxu0 %v231
    %639 = vmatpush1.bf16.msra.mxu0 %v230
    %640 = vmatprep.subr.bf16.mxu0 %v227
    %641 = vmatpush1.bf16.msra.mxu0 %v226
    %642 = vmatprep.subr.bf16.mxu0 %v223
    %643 = vmatpush1.bf16.msra.mxu0 %v222
    %644 = vmatprep.subr.bf16.mxu0 0
    %645 = vmatpush2.bf16.msra.mxu0 0
    %646 = vmatprep.subr.bf16.mxu0 0
    %647 = vmatpush2.bf16.msra.mxu0 0
    %648 = vmatprep.subr.bf16.mxu0 0
    %649 = vmatpush2.bf16.msra.mxu0 0
    %650 = vmatprep.subr.bf16.mxu0 0
    %651 = vmatpush2.bf16.msra.mxu0 0
    %652 = vmatprep.subr.bf16.mxu0 0
    %653 = vmatpush2.bf16.msra.mxu0 0
    %654 = vmatprep.subr.bf16.mxu0 0
    %655 = vmatpush2.bf16.msra.mxu0 0
    %656 = vmatprep.subr.bf16.mxu0 0
    %657 = vmatpush2.bf16.msra.mxu0 0
    %658 = vmatprep.subr.bf16.mxu0 0
    %659 = vmatpush2.bf16.msra.mxu0 0
    %660 = vmatprep.mubr.bf16.mxu0 0
    %661 = vmatmul.mubr.bf16.gmra.mxu0 %v586
    %v662 = vpop.f32.mrf.mxu0
    %v663 = vadd.f32 0.0, %v662
    %v664 = vpop.f32.mrf.mxu0
    %v665 = vadd.f32 0.0, %v664
    %v666 = vpop.f32.mrf.mxu0
    %v667 = vpop.f32.mrf.mxu0
    %668 = vdwg.mxu0
    %v673 = vcombine.low %v622, %v624
    %v674 = vcombine.low %v663, %v665
    %v676 = vunpack.c.l.s4 1966171168
    %v677 = vunpack.c.0.s8 %v676
    %v678 = vlaneseq
    %v679 = vshrl.u32 %v678, 7
    %v680 = vsub.s32 %v677, %v679
    %v681 = vrot.slane %v673, %v680
    %v683 = vunpack.c.l.s4 1966171168
    %v684 = vunpack.c.0.s8 %v683
    %v685 = vlaneseq
    %v686 = vshrl.u32 %v685, 7
    %v687 = vsub.s32 %v684, %v686
    %v688 = vrot.slane %v674, %v687
    %v689 = vcombine.low %v681, %v688
    %v691 = vunpack.c.l.s4 1966171168
    %v692 = vunpack.c.0.s8 %v691
    %v693 = vlaneseq
    %v694 = vshrl.u32 %v693, 7
    %v695 = vsub.s32 %v692, %v694
    %v696 = vrot.slane %v689, %v695
    %v698 = vadd.f32 %v585, %v696
    %v699 = vmul.f32 %v698, %v423
    %v700 = vtanh.pop %v699
    %v701 = vadd.f32 %v700, 1.0
    %v702 = vmul.f32 %v701, 0.5
    %v704 = vrot.slane %v700, 1
    %v706 = vadd.f32 %v704, 1.0
    %v707 = vmul.f32 %v706, 0.5
    %v708 = vrot.slane %v700, 3
    %v710 = vadd.f32 %v708, 1.0
    %v711 = vmul.f32 %v710, 0.5
    %v712 = vmul.f32 %v707, %v579
    %v713 = vrot.slane %v700, 2
    %v715 = vmul.f32 %v702, %v713
    %v716 = vadd.f32 %v712, %v715
    %v717 = vtanh.pop %v716
    %v718 = vmul.f32 %v711, %v717
    %s719 = sld [smem:[#allocation3 + $0x3]]
    %v720 = vstv %s719
    %v721 = vmul.f32 %v720, %v86
    %v722 = vadd.f32 %v721, %v87
    %v723 = vpack.c.bf16 %v718, %v718
    %724 = vmatprep.subr.bf16.mxu0 %v249
    %725 = vmatpush1.bf16.msra.mxu0 %v248
    %726 = vmatprep.subr.bf16.mxu0 %v245
    %727 = vmatpush1.bf16.msra.mxu0 %v244
    %728 = vmatprep.subr.bf16.mxu0 %v241
    %729 = vmatpush1.bf16.msra.mxu0 %v240
    %730 = vmatprep.subr.bf16.mxu0 %v237
    %731 = vmatpush1.bf16.msra.mxu0 %v236
    %732 = vmatprep.subr.bf16.mxu0 %v233
    %733 = vmatpush1.bf16.msra.mxu0 %v232
    %734 = vmatprep.subr.bf16.mxu0 %v229
    %735 = vmatpush1.bf16.msra.mxu0 %v228
    %736 = vmatprep.subr.bf16.mxu0 %v225
    %737 = vmatpush1.bf16.msra.mxu0 %v224
    %738 = vmatprep.subr.bf16.mxu0 %v221
    %739 = vmatpush1.bf16.msra.mxu0 %v220
    %740 = vmatprep.subr.bf16.mxu0 0
    %741 = vmatpush2.bf16.msra.mxu0 0
    %742 = vmatprep.subr.bf16.mxu0 0
    %743 = vmatpush2.bf16.msra.mxu0 0
    %744 = vmatprep.subr.bf16.mxu0 0
    %745 = vmatpush2.bf16.msra.mxu0 0
    %746 = vmatprep.subr.bf16.mxu0 0
    %747 = vmatpush2.bf16.msra.mxu0 0
    %748 = vmatprep.subr.bf16.mxu0 0
    %749 = vmatpush2.bf16.msra.mxu0 0
    %750 = vmatprep.subr.bf16.mxu0 0
    %751 = vmatpush2.bf16.msra.mxu0 0
    %752 = vmatprep.subr.bf16.mxu0 0
    %753 = vmatpush2.bf16.msra.mxu0 0
    %754 = vmatprep.subr.bf16.mxu0 0
    %755 = vmatpush2.bf16.msra.mxu0 0
    %756 = vmatprep.mubr.bf16.mxu0 0
    %757 = vmatmul.mubr.bf16.gmra.mxu0 %v723
    %v758 = vpop.f32.mrf.mxu0
    %v759 = vadd.f32 0.0, %v758
    %v760 = vpop.f32.mrf.mxu0
    %v761 = vadd.f32 0.0, %v760
    %v762 = vpop.f32.mrf.mxu0
    %v763 = vpop.f32.mrf.mxu0
    %764 = vdwg.mxu0
    %765 = vmatprep.subr.bf16.mxu0 %v251
    %766 = vmatpush1.bf16.msra.mxu0 %v250
    %767 = vmatprep.subr.bf16.mxu0 %v247
    %768 = vmatpush1.bf16.msra.mxu0 %v246
    %769 = vmatprep.subr.bf16.mxu0 %v243
    %770 = vmatpush1.bf16.msra.mxu0 %v242
    %771 = vmatprep.subr.bf16.mxu0 %v239
    %772 = vmatpush1.bf16.msra.mxu0 %v238
    %773 = vmatprep.subr.bf16.mxu0 %v235
    %774 = vmatpush1.bf16.msra.mxu0 %v234
    %775 = vmatprep.subr.bf16.mxu0 %v231
    %776 = vmatpush1.bf16.msra.mxu0 %v230
    %777 = vmatprep.subr.bf16.mxu0 %v227
    %778 = vmatpush1.bf16.msra.mxu0 %v226
    %779 = vmatprep.subr.bf16.mxu0 %v223
    %780 = vmatpush1.bf16.msra.mxu0 %v222
    %781 = vmatprep.subr.bf16.mxu0 0
    %782 = vmatpush2.bf16.msra.mxu0 0
    %783 = vmatprep.subr.bf16.mxu0 0
    %784 = vmatpush2.bf16.msra.mxu0 0
    %785 = vmatprep.subr.bf16.mxu0 0
    %786 = vmatpush2.bf16.msra.mxu0 0
    %787 = vmatprep.subr.bf16.mxu0 0
    %788 = vmatpush2.bf16.msra.mxu0 0
    %789 = vmatprep.subr.bf16.mxu0 0
    %790 = vmatpush2.bf16.msra.mxu0 0
    %791 = vmatprep.subr.bf16.mxu0 0
    %792 = vmatpush2.bf16.msra.mxu0 0
    %793 = vmatprep.subr.bf16.mxu0 0
    %794 = vmatpush2.bf16.msra.mxu0 0
    %795 = vmatprep.subr.bf16.mxu0 0
    %796 = vmatpush2.bf16.msra.mxu0 0
    %797 = vmatprep.mubr.bf16.mxu0 0
    %798 = vmatmul.mubr.bf16.gmra.mxu0 %v723
    %v799 = vpop.f32.mrf.mxu0
    %v800 = vadd.f32 0.0, %v799
    %v801 = vpop.f32.mrf.mxu0
    %v802 = vadd.f32 0.0, %v801
    %v803 = vpop.f32.mrf.mxu0
    %v804 = vpop.f32.mrf.mxu0
    %805 = vdwg.mxu0
    %v810 = vcombine.low %v759, %v761
    %v811 = vcombine.low %v800, %v802
    %v813 = vunpack.c.l.s4 1966171168
    %v814 = vunpack.c.0.s8 %v813
    %v815 = vlaneseq
    %v816 = vshrl.u32 %v815, 7
    %v817 = vsub.s32 %v814, %v816
    %v818 = vrot.slane %v810, %v817
    %v820 = vunpack.c.l.s4 1966171168
    %v821 = vunpack.c.0.s8 %v820
    %v822 = vlaneseq
    %v823 = vshrl.u32 %v822, 7
    %v824 = vsub.s32 %v821, %v823
    %v825 = vrot.slane %v811, %v824
    %v826 = vcombine.low %v818, %v825
    %v828 = vunpack.c.l.s4 1966171168
    %v829 = vunpack.c.0.s8 %v828
    %v830 = vlaneseq
    %v831 = vshrl.u32 %v830, 7
    %v832 = vsub.s32 %v829, %v831
    %v833 = vrot.slane %v826, %v832
    %v835 = vadd.f32 %v722, %v833
    %v836 = vmul.f32 %v835, %v423
    %v837 = vtanh.pop %v836
    %v838 = vadd.f32 %v837, 1.0
    %v839 = vmul.f32 %v838, 0.5
    %v841 = vrot.slane %v837, 1
    %v843 = vadd.f32 %v841, 1.0
    %v844 = vmul.f32 %v843, 0.5
    %v845 = vrot.slane %v837, 3
    %v847 = vadd.f32 %v845, 1.0
    %v848 = vmul.f32 %v847, 0.5
    %v849 = vmul.f32 %v844, %v716
    %v850 = vrot.slane %v837, 2
    %v852 = vmul.f32 %v839, %v850
    %v853 = vadd.f32 %v849, %v852
    %v854 = vtanh.pop %v853
    %v855 = vmul.f32 %v848, %v854
    %s856 = sld [smem:[#allocation3 + $0x4]]
    %v857 = vstv %s856
    %v858 = vmul.f32 %v857, %v86
    %v859 = vadd.f32 %v858, %v87
    %v860 = vpack.c.bf16 %v855, %v855
    %861 = vmatprep.subr.bf16.mxu0 %v249
    %862 = vmatpush1.bf16.msra.mxu0 %v248
    %863 = vmatprep.subr.bf16.mxu0 %v245
    %864 = vmatpush1.bf16.msra.mxu0 %v244
    %865 = vmatprep.subr.bf16.mxu0 %v241
    %866 = vmatpush1.bf16.msra.mxu0 %v240
    %867 = vmatprep.subr.bf16.mxu0 %v237
    %868 = vmatpush1.bf16.msra.mxu0 %v236
    %869 = vmatprep.subr.bf16.mxu0 %v233
    %870 = vmatpush1.bf16.msra.mxu0 %v232
    %871 = vmatprep.subr.bf16.mxu0 %v229
    %872 = vmatpush1.bf16.msra.mxu0 %v228
    %873 = vmatprep.subr.bf16.mxu0 %v225
    %874 = vmatpush1.bf16.msra.mxu0 %v224
    %875 = vmatprep.subr.bf16.mxu0 %v221
    %876 = vmatpush1.bf16.msra.mxu0 %v220
    %877 = vmatprep.subr.bf16.mxu0 0
    %878 = vmatpush2.bf16.msra.mxu0 0
    %879 = vmatprep.subr.bf16.mxu0 0
    %880 = vmatpush2.bf16.msra.mxu0 0
    %881 = vmatprep.subr.bf16.mxu0 0
    %882 = vmatpush2.bf16.msra.mxu0 0
    %883 = vmatprep.subr.bf16.mxu0 0
    %884 = vmatpush2.bf16.msra.mxu0 0
    %885 = vmatprep.subr.bf16.mxu0 0
    %886 = vmatpush2.bf16.msra.mxu0 0
    %887 = vmatprep.subr.bf16.mxu0 0
    %888 = vmatpush2.bf16.msra.mxu0 0
    %889 = vmatprep.subr.bf16.mxu0 0
    %890 = vmatpush2.bf16.msra.mxu0 0
    %891 = vmatprep.subr.bf16.mxu0 0
    %892 = vmatpush2.bf16.msra.mxu0 0
    %893 = vmatprep.mubr.bf16.mxu0 0
    %894 = vmatmul.mubr.bf16.gmra.mxu0 %v860
    %v895 = vpop.f32.mrf.mxu0
    %v896 = vadd.f32 0.0, %v895
    %v897 = vpop.f32.mrf.mxu0
    %v898 = vadd.f32 0.0, %v897
    %v899 = vpop.f32.mrf.mxu0
    %v900 = vpop.f32.mrf.mxu0
    %901 = vdwg.mxu0
    %902 = vmatprep.subr.bf16.mxu0 %v251
    %903 = vmatpush1.bf16.msra.mxu0 %v250
    %904 = vmatprep.subr.bf16.mxu0 %v247
    %905 = vmatpush1.bf16.msra.mxu0 %v246
    %906 = vmatprep.subr.bf16.mxu0 %v243
    %907 = vmatpush1.bf16.msra.mxu0 %v242
    %908 = vmatprep.subr.bf16.mxu0 %v239
    %909 = vmatpush1.bf16.msra.mxu0 %v238
    %910 = vmatprep.subr.bf16.mxu0 %v235
    %911 = vmatpush1.bf16.msra.mxu0 %v234
    %912 = vmatprep.subr.bf16.mxu0 %v231
    %913 = vmatpush1.bf16.msra.mxu0 %v230
    %914 = vmatprep.subr.bf16.mxu0 %v227
    %915 = vmatpush1.bf16.msra.mxu0 %v226
    %916 = vmatprep.subr.bf16.mxu0 %v223
    %917 = vmatpush1.bf16.msra.mxu0 %v222
    %918 = vmatprep.subr.bf16.mxu0 0
    %919 = vmatpush2.bf16.msra.mxu0 0
    %920 = vmatprep.subr.bf16.mxu0 0
    %921 = vmatpush2.bf16.msra.mxu0 0
    %922 = vmatprep.subr.bf16.mxu0 0
    %923 = vmatpush2.bf16.msra.mxu0 0
    %924 = vmatprep.subr.bf16.mxu0 0
    %925 = vmatpush2.bf16.msra.mxu0 0
    %926 = vmatprep.subr.bf16.mxu0 0
    %927 = vmatpush2.bf16.msra.mxu0 0
    %928 = vmatprep.subr.bf16.mxu0 0
    %929 = vmatpush2.bf16.msra.mxu0 0
    %930 = vmatprep.subr.bf16.mxu0 0
    %931 = vmatpush2.bf16.msra.mxu0 0
    %932 = vmatprep.subr.bf16.mxu0 0
    %933 = vmatpush2.bf16.msra.mxu0 0
    %934 = vmatprep.mubr.bf16.mxu0 0
    %935 = vmatmul.mubr.bf16.gmra.mxu0 %v860
    %v936 = vpop.f32.mrf.mxu0
    %v937 = vadd.f32 0.0, %v936
    %v938 = vpop.f32.mrf.mxu0
    %v939 = vadd.f32 0.0, %v938
    %v940 = vpop.f32.mrf.mxu0
    %v941 = vpop.f32.mrf.mxu0
    %942 = vdwg.mxu0
    %v947 = vcombine.low %v896, %v898
    %v948 = vcombine.low %v937, %v939
    %v950 = vunpack.c.l.s4 1966171168
    %v951 = vunpack.c.0.s8 %v950
    %v952 = vlaneseq
    %v953 = vshrl.u32 %v952, 7
    %v954 = vsub.s32 %v951, %v953
    %v955 = vrot.slane %v947, %v954
    %v957 = vunpack.c.l.s4 1966171168
    %v958 = vunpack.c.0.s8 %v957
    %v959 = vlaneseq
    %v960 = vshrl.u32 %v959, 7
    %v961 = vsub.s32 %v958, %v960
    %v962 = vrot.slane %v948, %v961
    %v963 = vcombine.low %v955, %v962
    %v965 = vunpack.c.l.s4 1966171168
    %v966 = vunpack.c.0.s8 %v965
    %v967 = vlaneseq
    %v968 = vshrl.u32 %v967, 7
    %v969 = vsub.s32 %v966, %v968
    %v970 = vrot.slane %v963, %v969
    %v972 = vadd.f32 %v859, %v970
    %v973 = vmul.f32 %v972, %v423
    %v974 = vtanh.pop %v973
    %v975 = vadd.f32 %v974, 1.0
    %v976 = vmul.f32 %v975, 0.5
    %v978 = vrot.slane %v974, 1
    %v980 = vadd.f32 %v978, 1.0
    %v981 = vmul.f32 %v980, 0.5
    %v982 = vrot.slane %v974, 3
    %v984 = vadd.f32 %v982, 1.0
    %v985 = vmul.f32 %v984, 0.5
    %v986 = vmul.f32 %v981, %v853
    %v987 = vrot.slane %v974, 2
    %v989 = vmul.f32 %v976, %v987
    %v990 = vadd.f32 %v986, %v989
    %v991 = vtanh.pop %v990
    %v992 = vmul.f32 %v985, %v991
    %s993 = sld [smem:[#allocation3 + $0x5]]
    %v994 = vstv %s993
    %v995 = vmul.f32 %v994, %v86
    %v996 = vadd.f32 %v995, %v87
    %v997 = vpack.c.bf16 %v992, %v992
    %998 = vmatprep.subr.bf16.mxu0 %v249
    %999 = vmatpush1.bf16.msra.mxu0 %v248
    %1000 = vmatprep.subr.bf16.mxu0 %v245
    %1001 = vmatpush1.bf16.msra.mxu0 %v244
    %1002 = vmatprep.subr.bf16.mxu0 %v241
    %1003 = vmatpush1.bf16.msra.mxu0 %v240
    %1004 = vmatprep.subr.bf16.mxu0 %v237
    %1005 = vmatpush1.bf16.msra.mxu0 %v236
    %1006 = vmatprep.subr.bf16.mxu0 %v233
    %1007 = vmatpush1.bf16.msra.mxu0 %v232
    %1008 = vmatprep.subr.bf16.mxu0 %v229
    %1009 = vmatpush1.bf16.msra.mxu0 %v228
    %1010 = vmatprep.subr.bf16.mxu0 %v225
    %1011 = vmatpush1.bf16.msra.mxu0 %v224
    %1012 = vmatprep.subr.bf16.mxu0 %v221
    %1013 = vmatpush1.bf16.msra.mxu0 %v220
    %1014 = vmatprep.subr.bf16.mxu0 0
    %1015 = vmatpush2.bf16.msra.mxu0 0
    %1016 = vmatprep.subr.bf16.mxu0 0
    %1017 = vmatpush2.bf16.msra.mxu0 0
    %1018 = vmatprep.subr.bf16.mxu0 0
    %1019 = vmatpush2.bf16.msra.mxu0 0
    %1020 = vmatprep.subr.bf16.mxu0 0
    %1021 = vmatpush2.bf16.msra.mxu0 0
    %1022 = vmatprep.subr.bf16.mxu0 0
    %1023 = vmatpush2.bf16.msra.mxu0 0
    %1024 = vmatprep.subr.bf16.mxu0 0
    %1025 = vmatpush2.bf16.msra.mxu0 0
    %1026 = vmatprep.subr.bf16.mxu0 0
    %1027 = vmatpush2.bf16.msra.mxu0 0
    %1028 = vmatprep.subr.bf16.mxu0 0
    %1029 = vmatpush2.bf16.msra.mxu0 0
    %1030 = vmatprep.mubr.bf16.mxu0 0
    %1031 = vmatmul.mubr.bf16.gmra.mxu0 %v997
    %v1032 = vpop.f32.mrf.mxu0
    %v1033 = vadd.f32 0.0, %v1032
    %v1034 = vpop.f32.mrf.mxu0
    %v1035 = vadd.f32 0.0, %v1034
    %v1036 = vpop.f32.mrf.mxu0
    %v1037 = vpop.f32.mrf.mxu0
    %1038 = vdwg.mxu0
    %1039 = vmatprep.subr.bf16.mxu0 %v251
    %1040 = vmatpush1.bf16.msra.mxu0 %v250
    %1041 = vmatprep.subr.bf16.mxu0 %v247
    %1042 = vmatpush1.bf16.msra.mxu0 %v246
    %1043 = vmatprep.subr.bf16.mxu0 %v243
    %1044 = vmatpush1.bf16.msra.mxu0 %v242
    %1045 = vmatprep.subr.bf16.mxu0 %v239
    %1046 = vmatpush1.bf16.msra.mxu0 %v238
    %1047 = vmatprep.subr.bf16.mxu0 %v235
    %1048 = vmatpush1.bf16.msra.mxu0 %v234
    %1049 = vmatprep.subr.bf16.mxu0 %v231
    %1050 = vmatpush1.bf16.msra.mxu0 %v230
    %1051 = vmatprep.subr.bf16.mxu0 %v227
    %1052 = vmatpush1.bf16.msra.mxu0 %v226
    %1053 = vmatprep.subr.bf16.mxu0 %v223
    %1054 = vmatpush1.bf16.msra.mxu0 %v222
    %1055 = vmatprep.subr.bf16.mxu0 0
    %1056 = vmatpush2.bf16.msra.mxu0 0
    %1057 = vmatprep.subr.bf16.mxu0 0
    %1058 = vmatpush2.bf16.msra.mxu0 0
    %1059 = vmatprep.subr.bf16.mxu0 0
    %1060 = vmatpush2.bf16.msra.mxu0 0
    %1061 = vmatprep.subr.bf16.mxu0 0
    %1062 = vmatpush2.bf16.msra.mxu0 0
    %1063 = vmatprep.subr.bf16.mxu0 0
    %1064 = vmatpush2.bf16.msra.mxu0 0
    %1065 = vmatprep.subr.bf16.mxu0 0
    %1066 = vmatpush2.bf16.msra.mxu0 0
    %1067 = vmatprep.subr.bf16.mxu0 0
    %1068 = vmatpush2.bf16.msra.mxu0 0
    %1069 = vmatprep.subr.bf16.mxu0 0
    %1070 = vmatpush2.bf16.msra.mxu0 0
    %1071 = vmatprep.mubr.bf16.mxu0 0
    %1072 = vmatmul.mubr.bf16.gmra.mxu0 %v997
    %v1073 = vpop.f32.mrf.mxu0
    %v1074 = vadd.f32 0.0, %v1073
    %v1075 = vpop.f32.mrf.mxu0
    %v1076 = vadd.f32 0.0, %v1075
    %v1077 = vpop.f32.mrf.mxu0
    %v1078 = vpop.f32.mrf.mxu0
    %1079 = vdwg.mxu0
    %v1084 = vcombine.low %v1033, %v1035
    %v1085 = vcombine.low %v1074, %v1076
    %v1087 = vunpack.c.l.s4 1966171168
    %v1088 = vunpack.c.0.s8 %v1087
    %v1089 = vlaneseq
    %v1090 = vshrl.u32 %v1089, 7
    %v1091 = vsub.s32 %v1088, %v1090
    %v1092 = vrot.slane %v1084, %v1091
    %v1094 = vunpack.c.l.s4 1966171168
    %v1095 = vunpack.c.0.s8 %v1094
    %v1096 = vlaneseq
    %v1097 = vshrl.u32 %v1096, 7
    %v1098 = vsub.s32 %v1095, %v1097
    %v1099 = vrot.slane %v1085, %v1098
    %v1100 = vcombine.low %v1092, %v1099
    %v1102 = vunpack.c.l.s4 1966171168
    %v1103 = vunpack.c.0.s8 %v1102
    %v1104 = vlaneseq
    %v1105 = vshrl.u32 %v1104, 7
    %v1106 = vsub.s32 %v1103, %v1105
    %v1107 = vrot.slane %v1100, %v1106
    %v1109 = vadd.f32 %v996, %v1107
    %v1110 = vmul.f32 %v1109, %v423
    %v1111 = vtanh.pop %v1110
    %v1112 = vadd.f32 %v1111, 1.0
    %v1113 = vmul.f32 %v1112, 0.5
    %v1115 = vrot.slane %v1111, 1
    %v1117 = vadd.f32 %v1115, 1.0
    %v1118 = vmul.f32 %v1117, 0.5
    %v1119 = vrot.slane %v1111, 3
    %v1121 = vadd.f32 %v1119, 1.0
    %v1122 = vmul.f32 %v1121, 0.5
    %v1123 = vmul.f32 %v1118, %v990
    %v1124 = vrot.slane %v1111, 2
    %v1126 = vmul.f32 %v1113, %v1124
    %v1127 = vadd.f32 %v1123, %v1126
    %v1128 = vtanh.pop %v1127
    %v1129 = vmul.f32 %v1122, %v1128
    %s1130 = sld [smem:[#allocation3 + $0x6]]
    %v1131 = vstv %s1130
    %v1132 = vmul.f32 %v1131, %v86
    %v1133 = vadd.f32 %v1132, %v87
    %v1134 = vpack.c.bf16 %v1129, %v1129
    %1135 = vmatprep.subr.bf16.mxu0 %v249
    %1136 = vmatpush1.bf16.msra.mxu0 %v248
    %1137 = vmatprep.subr.bf16.mxu0 %v245
    %1138 = vmatpush1.bf16.msra.mxu0 %v244
    %1139 = vmatprep.subr.bf16.mxu0 %v241
    %1140 = vmatpush1.bf16.msra.mxu0 %v240
    %1141 = vmatprep.subr.bf16.mxu0 %v237
    %1142 = vmatpush1.bf16.msra.mxu0 %v236
    %1143 = vmatprep.subr.bf16.mxu0 %v233
    %1144 = vmatpush1.bf16.msra.mxu0 %v232
    %1145 = vmatprep.subr.bf16.mxu0 %v229
    %1146 = vmatpush1.bf16.msra.mxu0 %v228
    %1147 = vmatprep.subr.bf16.mxu0 %v225
    %1148 = vmatpush1.bf16.msra.mxu0 %v224
    %1149 = vmatprep.subr.bf16.mxu0 %v221
    %1150 = vmatpush1.bf16.msra.mxu0 %v220
    %1151 = vmatprep.subr.bf16.mxu0 0
    %1152 = vmatpush2.bf16.msra.mxu0 0
    %1153 = vmatprep.subr.bf16.mxu0 0
    %1154 = vmatpush2.bf16.msra.mxu0 0
    %1155 = vmatprep.subr.bf16.mxu0 0
    %1156 = vmatpush2.bf16.msra.mxu0 0
    %1157 = vmatprep.subr.bf16.mxu0 0
    %1158 = vmatpush2.bf16.msra.mxu0 0
    %1159 = vmatprep.subr.bf16.mxu0 0
    %1160 = vmatpush2.bf16.msra.mxu0 0
    %1161 = vmatprep.subr.bf16.mxu0 0
    %1162 = vmatpush2.bf16.msra.mxu0 0
    %1163 = vmatprep.subr.bf16.mxu0 0
    %1164 = vmatpush2.bf16.msra.mxu0 0
    %1165 = vmatprep.subr.bf16.mxu0 0
    %1166 = vmatpush2.bf16.msra.mxu0 0
    %1167 = vmatprep.mubr.bf16.mxu0 0
    %1168 = vmatmul.mubr.bf16.gmra.mxu0 %v1134
    %v1169 = vpop.f32.mrf.mxu0
    %v1170 = vadd.f32 0.0, %v1169
    %v1171 = vpop.f32.mrf.mxu0
    %v1172 = vadd.f32 0.0, %v1171
    %v1173 = vpop.f32.mrf.mxu0
    %v1174 = vpop.f32.mrf.mxu0
    %1175 = vdwg.mxu0
    %1176 = vmatprep.subr.bf16.mxu0 %v251
    %1177 = vmatpush1.bf16.msra.mxu0 %v250
    %1178 = vmatprep.subr.bf16.mxu0 %v247
    %1179 = vmatpush1.bf16.msra.mxu0 %v246
    %1180 = vmatprep.subr.bf16.mxu0 %v243
    %1181 = vmatpush1.bf16.msra.mxu0 %v242
    %1182 = vmatprep.subr.bf16.mxu0 %v239
    %1183 = vmatpush1.bf16.msra.mxu0 %v238
    %1184 = vmatprep.subr.bf16.mxu0 %v235
    %1185 = vmatpush1.bf16.msra.mxu0 %v234
    %1186 = vmatprep.subr.bf16.mxu0 %v231
    %1187 = vmatpush1.bf16.msra.mxu0 %v230
    %1188 = vmatprep.subr.bf16.mxu0 %v227
    %1189 = vmatpush1.bf16.msra.mxu0 %v226
    %1190 = vmatprep.subr.bf16.mxu0 %v223
    %1191 = vmatpush1.bf16.msra.mxu0 %v222
    %1192 = vmatprep.subr.bf16.mxu0 0
    %1193 = vmatpush2.bf16.msra.mxu0 0
    %1194 = vmatprep.subr.bf16.mxu0 0
    %1195 = vmatpush2.bf16.msra.mxu0 0
    %1196 = vmatprep.subr.bf16.mxu0 0
    %1197 = vmatpush2.bf16.msra.mxu0 0
    %1198 = vmatprep.subr.bf16.mxu0 0
    %1199 = vmatpush2.bf16.msra.mxu0 0
    %1200 = vmatprep.subr.bf16.mxu0 0
    %1201 = vmatpush2.bf16.msra.mxu0 0
    %1202 = vmatprep.subr.bf16.mxu0 0
    %1203 = vmatpush2.bf16.msra.mxu0 0
    %1204 = vmatprep.subr.bf16.mxu0 0
    %1205 = vmatpush2.bf16.msra.mxu0 0
    %1206 = vmatprep.subr.bf16.mxu0 0
    %1207 = vmatpush2.bf16.msra.mxu0 0
    %1208 = vmatprep.mubr.bf16.mxu0 0
    %1209 = vmatmul.mubr.bf16.gmra.mxu0 %v1134
    %v1210 = vpop.f32.mrf.mxu0
    %v1211 = vadd.f32 0.0, %v1210
    %v1212 = vpop.f32.mrf.mxu0
    %v1213 = vadd.f32 0.0, %v1212
    %v1214 = vpop.f32.mrf.mxu0
    %v1215 = vpop.f32.mrf.mxu0
    %1216 = vdwg.mxu0
    %v1221 = vcombine.low %v1170, %v1172
    %v1222 = vcombine.low %v1211, %v1213
    %v1224 = vunpack.c.l.s4 1966171168
    %v1225 = vunpack.c.0.s8 %v1224
    %v1226 = vlaneseq
    %v1227 = vshrl.u32 %v1226, 7
    %v1228 = vsub.s32 %v1225, %v1227
    %v1229 = vrot.slane %v1221, %v1228
    %v1231 = vunpack.c.l.s4 1966171168
    %v1232 = vunpack.c.0.s8 %v1231
    %v1233 = vlaneseq
    %v1234 = vshrl.u32 %v1233, 7
    %v1235 = vsub.s32 %v1232, %v1234
    %v1236 = vrot.slane %v1222, %v1235
    %v1237 = vcombine.low %v1229, %v1236
    %v1239 = vunpack.c.l.s4 1966171168
    %v1240 = vunpack.c.0.s8 %v1239
    %v1241 = vlaneseq
    %v1242 = vshrl.u32 %v1241, 7
    %v1243 = vsub.s32 %v1240, %v1242
    %v1244 = vrot.slane %v1237, %v1243
    %v1246 = vadd.f32 %v1133, %v1244
    %v1247 = vmul.f32 %v1246, %v423
    %v1248 = vtanh.pop %v1247
    %v1249 = vadd.f32 %v1248, 1.0
    %v1250 = vmul.f32 %v1249, 0.5
    %v1252 = vrot.slane %v1248, 1
    %v1254 = vadd.f32 %v1252, 1.0
    %v1255 = vmul.f32 %v1254, 0.5
    %v1256 = vrot.slane %v1248, 3
    %v1258 = vadd.f32 %v1256, 1.0
    %v1259 = vmul.f32 %v1258, 0.5
    %v1260 = vmul.f32 %v1255, %v1127
    %v1261 = vrot.slane %v1248, 2
    %v1263 = vmul.f32 %v1250, %v1261
    %v1264 = vadd.f32 %v1260, %v1263
    %v1265 = vtanh.pop %v1264
    %v1266 = vmul.f32 %v1259, %v1265
    %s1267 = sld [smem:[#allocation3 + $0x7]]
    %v1268 = vstv %s1267
    %v1269 = vmul.f32 %v1268, %v86
    %v1270 = vadd.f32 %v1269, %v87
    %v1271 = vpack.c.bf16 %v1266, %v1266
    %1272 = vmatprep.subr.bf16.mxu0 %v249
    %1273 = vmatpush1.bf16.msra.mxu0 %v248
    %1274 = vmatprep.subr.bf16.mxu0 %v245
    %1275 = vmatpush1.bf16.msra.mxu0 %v244
    %1276 = vmatprep.subr.bf16.mxu0 %v241
    %1277 = vmatpush1.bf16.msra.mxu0 %v240
    %1278 = vmatprep.subr.bf16.mxu0 %v237
    %1279 = vmatpush1.bf16.msra.mxu0 %v236
    %1280 = vmatprep.subr.bf16.mxu0 %v233
    %1281 = vmatpush1.bf16.msra.mxu0 %v232
    %1282 = vmatprep.subr.bf16.mxu0 %v229
    %1283 = vmatpush1.bf16.msra.mxu0 %v228
    %1284 = vmatprep.subr.bf16.mxu0 %v225
    %1285 = vmatpush1.bf16.msra.mxu0 %v224
    %1286 = vmatprep.subr.bf16.mxu0 %v221
    %1287 = vmatpush1.bf16.msra.mxu0 %v220
    %1288 = vmatprep.subr.bf16.mxu0 0
    %1289 = vmatpush2.bf16.msra.mxu0 0
    %1290 = vmatprep.subr.bf16.mxu0 0
    %1291 = vmatpush2.bf16.msra.mxu0 0
    %1292 = vmatprep.subr.bf16.mxu0 0
    %1293 = vmatpush2.bf16.msra.mxu0 0
    %1294 = vmatprep.subr.bf16.mxu0 0
    %1295 = vmatpush2.bf16.msra.mxu0 0
    %1296 = vmatprep.subr.bf16.mxu0 0
    %1297 = vmatpush2.bf16.msra.mxu0 0
    %1298 = vmatprep.subr.bf16.mxu0 0
    %1299 = vmatpush2.bf16.msra.mxu0 0
    %1300 = vmatprep.subr.bf16.mxu0 0
    %1301 = vmatpush2.bf16.msra.mxu0 0
    %1302 = vmatprep.subr.bf16.mxu0 0
    %1303 = vmatpush2.bf16.msra.mxu0 0
    %1304 = vmatprep.mubr.bf16.mxu0 0
    %1305 = vmatmul.mubr.bf16.gmra.mxu0 %v1271
    %v1306 = vpop.f32.mrf.mxu0
    %v1307 = vadd.f32 0.0, %v1306
    %v1308 = vpop.f32.mrf.mxu0
    %v1309 = vadd.f32 0.0, %v1308
    %v1310 = vpop.f32.mrf.mxu0
    %v1311 = vpop.f32.mrf.mxu0
    %1312 = vdwg.mxu0
    %1313 = vmatprep.subr.bf16.mxu0 %v251
    %1314 = vmatpush1.bf16.msra.mxu0 %v250
    %1315 = vmatprep.subr.bf16.mxu0 %v247
    %1316 = vmatpush1.bf16.msra.mxu0 %v246
    %1317 = vmatprep.subr.bf16.mxu0 %v243
    %1318 = vmatpush1.bf16.msra.mxu0 %v242
    %1319 = vmatprep.subr.bf16.mxu0 %v239
    %1320 = vmatpush1.bf16.msra.mxu0 %v238
    %1321 = vmatprep.subr.bf16.mxu0 %v235
    %1322 = vmatpush1.bf16.msra.mxu0 %v234
    %1323 = vmatprep.subr.bf16.mxu0 %v231
    %1324 = vmatpush1.bf16.msra.mxu0 %v230
    %1325 = vmatprep.subr.bf16.mxu0 %v227
    %1326 = vmatpush1.bf16.msra.mxu0 %v226
    %1327 = vmatprep.subr.bf16.mxu0 %v223
    %1328 = vmatpush1.bf16.msra.mxu0 %v222
    %1329 = vmatprep.subr.bf16.mxu0 0
    %1330 = vmatpush2.bf16.msra.mxu0 0
    %1331 = vmatprep.subr.bf16.mxu0 0
    %1332 = vmatpush2.bf16.msra.mxu0 0
    %1333 = vmatprep.subr.bf16.mxu0 0
    %1334 = vmatpush2.bf16.msra.mxu0 0
    %1335 = vmatprep.subr.bf16.mxu0 0
    %1336 = vmatpush2.bf16.msra.mxu0 0
    %1337 = vmatprep.subr.bf16.mxu0 0
    %1338 = vmatpush2.bf16.msra.mxu0 0
    %1339 = vmatprep.subr.bf16.mxu0 0
    %1340 = vmatpush2.bf16.msra.mxu0 0
    %1341 = vmatprep.subr.bf16.mxu0 0
    %1342 = vmatpush2.bf16.msra.mxu0 0
    %1343 = vmatprep.subr.bf16.mxu0 0
    %1344 = vmatpush2.bf16.msra.mxu0 0
    %1345 = vmatprep.mubr.bf16.mxu0 0
    %1346 = vmatmul.mubr.bf16.gmra.mxu0 %v1271
    %v1347 = vpop.f32.mrf.mxu0
    %v1348 = vadd.f32 0.0, %v1347
    %v1349 = vpop.f32.mrf.mxu0
    %v1350 = vadd.f32 0.0, %v1349
    %v1351 = vpop.f32.mrf.mxu0
    %v1352 = vpop.f32.mrf.mxu0
    %1353 = vdwg.mxu0
    %v1358 = vcombine.low %v1307, %v1309
    %v1359 = vcombine.low %v1348, %v1350
    %v1361 = vunpack.c.l.s4 1966171168
    %v1362 = vunpack.c.0.s8 %v1361
    %v1363 = vlaneseq
    %v1364 = vshrl.u32 %v1363, 7
    %v1365 = vsub.s32 %v1362, %v1364
    %v1366 = vrot.slane %v1358, %v1365
    %v1368 = vunpack.c.l.s4 1966171168
    %v1369 = vunpack.c.0.s8 %v1368
    %v1370 = vlaneseq
    %v1371 = vshrl.u32 %v1370, 7
    %v1372 = vsub.s32 %v1369, %v1371
    %v1373 = vrot.slane %v1359, %v1372
    %v1374 = vcombine.low %v1366, %v1373
    %v1376 = vunpack.c.l.s4 1966171168
    %v1377 = vunpack.c.0.s8 %v1376
    %v1378 = vlaneseq
    %v1379 = vshrl.u32 %v1378, 7
    %v1380 = vsub.s32 %v1377, %v1379
    %v1381 = vrot.slane %v1374, %v1380
    %v1383 = vadd.f32 %v1270, %v1381
    %v1384 = vmul.f32 %v1383, %v423
    %v1385 = vtanh.pop %v1384
    %v1386 = vadd.f32 %v1385, 1.0
    %v1387 = vmul.f32 %v1386, 0.5
    %v1389 = vrot.slane %v1385, 1
    %v1391 = vadd.f32 %v1389, 1.0
    %v1392 = vmul.f32 %v1391, 0.5
    %v1393 = vrot.slane %v1385, 3
    %v1395 = vadd.f32 %v1393, 1.0
    %v1396 = vmul.f32 %v1395, 0.5
    %v1397 = vmul.f32 %v1392, %v1264
    %v1398 = vrot.slane %v1385, 2
    %v1400 = vmul.f32 %v1387, %v1398
    %v1401 = vadd.f32 %v1397, %v1400
    %v1402 = vtanh.pop %v1401
    %v1403 = vmul.f32 %v1396, %v1402
    %v1404 = vld [vmem:[%s4] sm:$0x1]
    %v1405 = vmul.f32 %v1403, %v1404
    %vm1406 = vcmask 1040384
    %v1407 = vsel %vm1406, %v1405, 0.0
    %1408 = vadd.xlane.f32.xlu0 %v1407
    %v1409 = vpop.xlane.xlu0 %1408
    %s1410 = sld [smem:[#allocation2]]
    %v1411 = vstv %s1410
    %v1412 = vadd.f32 %v1409, %v1411
    %vm1413 = vcmask 0
    %1414 = vst.msk [vmem:[#allocation10] sm:$0x1] %vm1413, %v1412
    // Predicated region
    $region38: #{tpu_custom_call.1} parent=1 // pred_check
      _
    $region39: #{tpu_custom_call.1} parent=1 // pred_check_branch
      %1416 = sbr.rel (0) target = $region41
    $region40: #{tpu_custom_call.1} parent=1 // pred_region
      %s1418 = ssub.s32 16, 16
      %1419 = vsyncadd [#allocation5], %s1418
      %s1421 = sshll.u32 [#allocation10], 4
      %s1422 = int_to_ptr.vmem [resolvable:$true] %s1421
      %1424 = dma.vmem_to_hbm [thread:$0]  %s1422, 16, %s6, [#allocation5]
    $region41: #{tpu_custom_call.1} parent=1 // pred_fallthru
      _
    // Predicated region
    $region42: #{tpu_custom_call.1} parent=1 // pred_check
      _
    $region43: #{tpu_custom_call.1} parent=1 // pred_check_branch
      %1426 = sbr.rel (0) target = $region45
    $region44: #{tpu_custom_call.1} parent=1 // pred_region
      %1427 = dma.done [#allocation5], 16
    $region45: #{tpu_custom_call.1} parent=1 // pred_fallthru
      _
    %1428 = vsyncpa [#allocation4], 1
    %1429 = vsyncpa [#allocation9], 1
    %1430 = vsyncpa [#allocation5], 1
    %1431 = vsyncpa [#allocation6], 1

</llo_original>
